<compile_context>
chip_gen: v5e
topology: v5e:2x2
jax: 0.10.0
libtpu: 0.0.40
codegen_flags: <defaults>
</compile_context>

<pallas_src>
import functools

import jax
import jax.numpy as jnp
from jax.experimental import pallas as pl
from jax.experimental.pallas import tpu as pltpu


_SMALL_TOTAL = 256 * 1024           # below this, plain XLA beats pallas dispatch
_LANE_CHOICES = (1024, 512, 256, 128)


def _rating_scaler_kernel(x_ref, o_ref):
    # Elementwise hot path on the whole VMEM tile (VPU); constants are created
    # in the input dtype so there is no unintended promotion.
    x = x_ref[...]
    o_ref[...] = x * jnp.asarray(4, x.dtype) + jnp.asarray(1, x.dtype)


def _scale_ref(x):
    # Plain-XLA path (small inputs / ragged tails).
    return x * jnp.asarray(4, x.dtype) + jnp.asarray(1, x.dtype)


@functools.lru_cache(maxsize=None)
def _chip_config():
    """Per-generation tile size / core split / VMEM limit."""
    kind = ""
    try:
        kind = jax.devices()[0].device_kind.lower()
    except Exception:
        pass
    if "v7" in kind:
        # 2 TCs, 64 MiB physical VMEM, ~3.2 TB/s HBM: larger tiles amortize the
        # ~0.35 us per-grid-step overhead; 4 x 6 MiB buffers << 48 MiB limit.
        return {"tile_bytes": 6 << 20, "num_cores": 2, "vmem_limit": 48 << 20}
    if "v6" in kind:
        # 32 MiB scoped default; 4 x 4 MiB buffers is comfortably inside it.
        return {"tile_bytes": 4 << 20, "num_cores": 1, "vmem_limit": 32 << 20}
    # v5e (16 MiB scoped-VMEM default) / unknown chip: stay conservative.
    return {"tile_bytes": 2 << 20, "num_cores": 1, "vmem_limit": None}


def _scale_2d(x2d):
    """Run the kernel over a lane-dense (rows, lanes) slab."""
    rows, lanes = x2d.shape
    dtype = x2d.dtype
    itemsize = jnp.dtype(dtype).itemsize
    # Sublane packing multiple: 8 rows for 4-byte dtypes, 16 for 2-byte, 32 for
    # 1-byte (sub-32-bit dtypes pack along sublanes).
    sub = max(8, 32 // itemsize)
    cfg = _chip_config()

    cap_rows = max(sub, (cfg["tile_bytes"] // (lanes * itemsize)) // sub * sub)
    if rows <= cap_rows:
        row_tile = rows          # single full-dim block (always a legal shape)
    else:
        row_tile = cap_rows      # multiple of sub; last block may be partial

    num_tiles = pl.cdiv(rows, row_tile)
    num_cores = cfg["num_cores"]

    compiler_kwargs = {}
    if cfg["vmem_limit"] is not None:
        compiler_kwargs["vmem_limit_bytes"] = cfg["vmem_limit"]

    def _call(grid, index_map, dims):
        return pl.pallas_call(
            _rating_scaler_kernel,
            out_shape=jax.ShapeDtypeStruct((rows, lanes), dtype),
            grid_spec=pltpu.PrefetchScalarGridSpec(
                num_scalar_prefetch=0,
                grid=grid,
                in_specs=[pl.BlockSpec((row_tile, lanes), index_map)],
                out_specs=pl.BlockSpec((row_tile, lanes), index_map),
            ),
            compiler_params=pltpu.CompilerParams(
                dimension_semantics=dims, **compiler_kwargs),
        )(x2d)

    if num_cores > 1 and num_tiles > 1:
        # Explicit 2-TensorCore split (v7x): leading CORE_PARALLEL axis of size
        # num_cores, inner axis iterates this core's share of row tiles.
        tiles_per_core = pl.cdiv(num_tiles, num_cores)
        last_tile = num_tiles - 1

        def core_map_fn(c, i):
            # Clamp overflow iterations of an uneven split onto the last tile;
            # rewriting it with identical values is harmless (idempotent).
            return (jnp.minimum(c * tiles_per_core + i, last_tile), 0)

        dims = (getattr(pltpu, "CORE_PARALLEL", "parallel"),
                getattr(pltpu, "ARBITRARY", "arbitrary"))
        try:
            return _call((num_cores, tiles_per_core), core_map_fn, dims)
        except Exception:
            pass  # fall back to the single-core grid below

    return _call((num_tiles,), lambda i: (i, 0), ("parallel",))


def rating_scaler(x: jax.Array) -> jax.Array:
    """Applies y = 4*x + 1 elementwise (Pallas TPU kernel for large inputs)."""
    orig_shape = x.shape
    total = x.size
    if total < _SMALL_TOTAL:
        # Tiny tensors (and empty ones): XLA fuses this for free.
        return _scale_ref(x)

    lanes = next((l for l in _LANE_CHOICES if total % l == 0), None)
    flat = x.reshape(-1)  # row-major flatten: no copy

    if lanes is not None:
        out2d = _scale_2d(flat.reshape(total // lanes, lanes))
        return out2d.reshape(orig_shape)

    # Ragged element count (not a multiple of 128): run the kernel on the
    # 1024-aligned prefix and handle the <1024-element tail with plain XLA.
    lanes = _LANE_CHOICES[0]
    main_total = (total // lanes) * lanes
    out_main = _scale_2d(flat[:main_total].reshape(main_total // lanes, lanes))
    out_tail = _scale_ref(flat[main_total:])
    return jnp.concatenate([out_main.reshape(-1), out_tail]).reshape(orig_shape)


if __name__ == "__main__":
    key = jax.random.PRNGKey(0)
    k0, k1, k2, k3, k4 = jax.random.split(key, 5)

    # Canonical small input (fast path): N=2, C=4, H=16, W=16.
    x_small = jax.random.normal(k0, (2, 4, 16, 16), dtype=jnp.float32)
    y_small = jax.block_until_ready(rating_scaler(x_small))
    assert y_small.shape == x_small.shape and y_small.dtype == x_small.dtype
    assert jnp.allclose(y_small, 4.0 * x_small + 1.0, atol=1e-6, rtol=1e-6)

    # Larger input exercising the Pallas kernel path (1,048,576 elements).
    x_big = jax.random.normal(k1, (256, 4, 16, 64), dtype=jnp.float32)
    y_big = jax.block_until_ready(rating_scaler(x_big))
    assert y_big.shape == x_big.shape and y_big.dtype == x_big.dtype
    assert jnp.allclose(y_big, 4.0 * x_big + 1.0, atol=1e-6, rtol=1e-6)

    # Rows not a multiple of 8 nor of the row tile -> masked partial last block.
    x_part = jax.random.normal(k2, (1100, 1024), dtype=jnp.float32)
    y_part = jax.block_until_ready(rating_scaler(x_part))
    assert jnp.allclose(y_part, 4.0 * x_part + 1.0, atol=1e-6, rtol=1e-6)

    # Ragged element count (not a multiple of 128): prefix kernel + XLA tail.
    x_rag = jax.random.normal(k3, (257, 1001), dtype=jnp.float32)
    y_rag = jax.block_until_ready(rating_scaler(x_rag))
    assert y_rag.shape == x_rag.shape
    assert jnp.allclose(y_rag, 4.0 * x_rag + 1.0, atol=1e-6, rtol=1e-6)

    # bf16 path (sublane packing multiple of 16).
    x_bf = jax.random.normal(k4, (512, 1024), dtype=jnp.bfloat16)
    y_bf = jax.block_until_ready(rating_scaler(x_bf))
    assert y_bf.shape == x_bf.shape and y_bf.dtype == jnp.bfloat16
    assert jnp.allclose(y_bf.astype(jnp.float32),
                        4.0 * x_bf.astype(jnp.float32) + 1.0,
                        atol=0.25, rtol=2e-2)

    print("KERNEL_OK")
</pallas_src>

<mosaic_0001>
module attributes {stable_mosaic.version = 11 : i64} {
  func.func @_rating_scaler_kernel(%arg0: i32, %arg1: memref<512x1024xf32, #tpu.memory_space<vmem>>, %arg2: memref<512x1024xf32, #tpu.memory_space<vmem>>) attributes {dimension_semantics = [#tpu.dimension_semantics<parallel>], iteration_bounds = array<i64: 2>, scalar_prefetch = 0 : i64, scratch_operands = 0 : i64, tpu.core_type = #tpu.core_type<tc>, window_params = [{transform_indices = @transform_0, window_bounds = array<i64: 512, 1024>}, {transform_indices = @transform_1, window_bounds = array<i64: 512, 1024>}]} {
    %c0 = arith.constant 0 : index
    %c0_0 = arith.constant 0 : index
    %0 = vector.load %arg1[%c0, %c0_0] : memref<512x1024xf32, #tpu.memory_space<vmem>>, vector<512x1024xf32>
    %cst = arith.constant 4.000000e+00 : f32
    %1 = vector.broadcast %cst : f32 to vector<512x1024xf32>
    %2 = arith.mulf %0, %1 : vector<512x1024xf32>
    %cst_1 = arith.constant 1.000000e+00 : f32
    %3 = vector.broadcast %cst_1 : f32 to vector<512x1024xf32>
    %4 = arith.addf %2, %3 : vector<512x1024xf32>
    %c0_2 = arith.constant 0 : index
    %c0_3 = arith.constant 0 : index
    %5 = vector.load %arg2[%c0_2, %c0_3] : memref<512x1024xf32, #tpu.memory_space<vmem>>, vector<512x1024xf32>
    tpu.vector_store %arg2[%c0_2, %c0_3], %4 {strides = array<i32>} : memref<512x1024xf32, #tpu.memory_space<vmem>>, vector<512x1024xf32>,
    return
  }
  func.func @transform_0(%arg0: i32) -> (i32, i32) {
    %c0_i32 = arith.constant 0 : i32
    %c0_i32_0 = arith.constant 0 : i32
    return %arg0, %c0_i32 : i32, i32
  }
  func.func @transform_1(%arg0: i32) -> (i32, i32) {
    %c0_i32 = arith.constant 0 : i32
    %c0_i32_0 = arith.constant 0 : i32
    return %arg0, %c0_i32 : i32, i32
  }
}

</mosaic_0001>

<llo_original>
// kernel: tpu_custom_call.1
$region0: #{tpu_custom_call.1}
  #allocation0 [shape = 'u32[]', space=smem, size = 0x4, offset = 0x4, fixed_abs, tag = 'smem constant byte address 0x4 - core index']
  #allocation1 [shape = 'u32[72,128]{1,0:T(1,128)}', space=vmem, size = 0x9000, scoped, tag = 'internal scratch']
  %s0 = inlined_call_operand.hbm [shape: f32[1024,1024], index: 0, kind: input, shape index: {}]
  %s1 = inlined_call_operand.hbm [shape: f32[1024,1024], index: 1, kind: output, shape index: {}]
  %s2 = sld [smem:[#allocation0]]
  $region41: #{tpu_custom_call.1} parent=0
    _
  %s4 = ssub.s32 1, %s2
  %s5 = scalar_select 0, %s4, %s2
  $region1: #{tpu_custom_call.1} parent=0
    #allocation2 [shape = 'u8[4194304]{0}', space=vmem, size = 0x400000, scoped, tag = 'input window, operand 0']
    #allocation3 [shape = 's32[2]{0}', space=sflag, size = 0x8, scoped, tag = 'scoped memory for tpu_custom_call.1']
    #allocation4 [shape = 's32[2]{0}', space=sflag, size = 0x8, scoped, tag = 'scoped memory for tpu_custom_call.1']
    #allocation5 [shape = 'u8[4194304]{0}', space=vmem, size = 0x400000, scoped, tag = 'output window, operand 0']
    %6 = vsyncpa [#allocation3], 0
    %s7 = scalar_lea.sflag [#allocation3], 1
    %8 = vsyncpa %s7, 0
    %9 = vsyncpa [#allocation4], 0
    %s10 = scalar_lea.sflag [#allocation4], 1
    %11 = vsyncpa %s10, 0
    loop: start=0, step=1, limit=4
    $region2: #{tpu_custom_call.1} parent=1 // loop_pre_header
      _
    $region3: #{tpu_custom_call.1} parent=1 // loop_header
      %s13 = sphi 0, %s17
      %p14 = scmp.ge.s32.totalorder %s13, 4
      %s23 = sphi 0, %s25
      %s26 = sphi 0, %s23
      %s27 = sphi 0, %s26
      %s43 = sphi 0, %s27
      %s49 = sphi 0, %s51
      %s52 = sphi 0, %s49
      %s53 = sphi 0, %s52
      %s69 = sphi 0, %s53
    $region4: #{tpu_custom_call.1} parent=1 // loop_header_branch
      %16 = sbr.rel (%p14) target = $region8
    $region5: #{tpu_custom_call.1} parent=1 // loop_body
      %s18 = ssub.s32 %s13, 1
      %s19 = ssub.s32 %s13, 2
      %s20 = sadd.s32 %s13, 1
      %s21 = ssub.s32 %s13, %s20
      %p22 = scmp.eq.s32.totalorder %s21, 0
      %s24 = sadd.s32 %s23, 1
      %s25 = scalar_select %p22, %s23, %s24
      %p28 = pneg %p22
      %p29 = scmp.eq.s32.totalorder %s13, 1
      %p30 = por %p28, %p29
      %p31 = scmp.ne.s32.totalorder %s23, %s26
      %p32 = scmp.eq.s32.totalorder %s13, 0
      %p33 = por %p31, %p32
      %p34 = scmp.ne.s32.totalorder %s23, %s26
      %p35 = scmp.eq.s32.totalorder %s18, 1
      %p36 = por %p34, %p35
      %p37 = scmp.ne.s32.totalorder %s26, %s27
      %p38 = scmp.eq.s32.totalorder %s18, 0
      %p39 = por %p37, %p38
      %p40 = scmp.ne.s32.totalorder %s26, %s27
      %p41 = scmp.eq.s32.totalorder %s19, 1
      %p42 = por %p40, %p41
      %p44 = scmp.ne.s32.totalorder %s27, %s43
      %p45 = scmp.eq.s32.totalorder %s19, 0
      %p46 = por %p44, %p45
      %s47 = ssub.s32 %s13, %s20
      %p48 = scmp.eq.s32.totalorder %s47, 0
      %s50 = sadd.s32 %s49, 1
      %s51 = scalar_select %p48, %s49, %s50
      %p54 = pneg %p48
      %p55 = scmp.eq.s32.totalorder %s13, 1
      %p56 = por %p54, %p55
      %p57 = scmp.ne.s32.totalorder %s49, %s52
      %p58 = scmp.eq.s32.totalorder %s13, 0
      %p59 = por %p57, %p58
      %p60 = scmp.ne.s32.totalorder %s49, %s52
      %p61 = scmp.eq.s32.totalorder %s18, 1
      %p62 = por %p60, %p61
      %p63 = scmp.ne.s32.totalorder %s52, %s53
      %p64 = scmp.eq.s32.totalorder %s18, 0
      %p65 = por %p63, %p64
      %p66 = scmp.ne.s32.totalorder %s52, %s53
      %p67 = scmp.eq.s32.totalorder %s19, 1
      %p68 = por %p66, %p67
      %p70 = scmp.ne.s32.totalorder %s53, %s69
      %p71 = scmp.eq.s32.totalorder %s19, 0
      %p72 = por %p70, %p71
      %p73 = scmp.le.s32.totalorder 1, %s13
      %p74 = scmp.lt.s32.totalorder %s13, 3
      %p75 = pnand %p73, %p74
      %p76 = pneg %p75
      // Predicated region
      $region9: #{tpu_custom_call.1} parent=5 // pred_check
        _
      $region10: #{tpu_custom_call.1} parent=5 // pred_check_branch
        %78 = sbr.rel (%p75) target = $region12
      $region11: #{tpu_custom_call.1} parent=5 // pred_region
        %s79 = ssub.s32 %s13, 1
      $region12: #{tpu_custom_call.1} parent=5 // pred_fallthru
        _
      %p80 = scmp.lt.s32.totalorder %s13, 2
      // Predicated region
      $region13: #{tpu_custom_call.1} parent=5 // pred_check
        %p81 = pneg %p80
      $region14: #{tpu_custom_call.1} parent=5 // pred_check_branch
        %83 = sbr.rel (%p81) target = $region16
      $region15: #{tpu_custom_call.1} parent=5 // pred_region
        // Predicated region
        $region17: #{tpu_custom_call.1} parent=15 // pred_check
          %p84 = pneg %p33
        $region18: #{tpu_custom_call.1} parent=15 // pred_check_branch
          %86 = sbr.rel (%p84) target = $region20
        $region19: #{tpu_custom_call.1} parent=15 // pred_region
          %s87 = sand.u32 %s23, 1
          %s88 = scalar_lea.sflag [#allocation3], %s87
          %s89 = sand.u32 %s23, 1
          %s90 = smul.addr %s89, 4096
          %s91 = scalar_lea.vmem [#allocation2], %s90
          %s92 = smul.u32 64, %s13
          %94 = vsyncadd %s88, 0
          %s95 = smul.addr %s92, 8
          %s96 = smul.addr %s95, 8
          %s97 = scalar_lea.hbm %s0, %s96
          %s98 = sshll.u32 %s97, 4
          %s99 = int_to_ptr.hbm [resolvable:$true] %s98
          %s100 = sshll.u32 %s91, 4
          %s101 = int_to_ptr.vmem [resolvable:$true] %s100
          %106 = dma.hbm_to_vmem [thread:$0]  %s99, 65536, %s101, %s88, 1024, 1024, 64
        $region20: #{tpu_custom_call.1} parent=15 // pred_fallthru
          _
      $region16: #{tpu_custom_call.1} parent=5 // pred_fallthru
        _
      %p107 = scmp.le.s32.totalorder 1, %s13
      %p108 = scmp.lt.s32.totalorder %s13, 3
      %p109 = pnand %p107, %p108
      %p110 = pneg %p109
      // Predicated region
      $region21: #{tpu_custom_call.1} parent=5 // pred_check
        _
      $region22: #{tpu_custom_call.1} parent=5 // pred_check_branch
        %112 = sbr.rel (%p109) target = $region24
      $region23: #{tpu_custom_call.1} parent=5 // pred_region
        %s113 = ssub.s32 %s13, 1
        %s114 = sand.u32 %s26, 1
        %s115 = scalar_lea.sflag [#allocation3], %s114
        %s116 = sand.u32 %s26, 1
        %s117 = smul.addr %s116, 4096
        %s118 = scalar_lea.vmem [#allocation2], %s117
        // Predicated region
        $region25: #{tpu_custom_call.1} parent=23 // pred_check
          %p119 = pneg %p39
        $region26: #{tpu_custom_call.1} parent=23 // pred_check_branch
          %121 = sbr.rel (%p119) target = $region28
        $region27: #{tpu_custom_call.1} parent=23 // pred_region
          %123 = dma.done %s115, 65536
        $region28: #{tpu_custom_call.1} parent=23 // pred_fallthru
          _
        %s124 = sand.u32 %s26, 1
        %s125 = scalar_lea.sflag [#allocation3], %s124
        %s126 = sand.u32 %s26, 1
        %s127 = smul.addr %s126, 4096
        %s128 = scalar_lea.vmem [#allocation2], %s127
        %p129 = pneg %p39
        %p130 = pneg %p36
        %p131 = pneg %p65
        %p132 = pneg %p62
        %s133 = sand.u32 %s52, 1
        %s134 = scalar_lea.sflag [#allocation4], %s133
        %s135 = sand.u32 %s52, 1
        %s136 = smul.addr %s135, 4096
        %s137 = scalar_lea.vmem [#allocation5], %s136
        %s138 = smul.u32 64, %s18
        %s139 = smul.u32 64, %s18
        %v140 = vld [vmem:[%s118] sm:$0xff]
        %v141 = vld [vmem:[%s118 + $0x8] sm:$0xff]
        %v142 = vld [vmem:[%s118 + $0x10] sm:$0xff]
        %v143 = vld [vmem:[%s118 + $0x18] sm:$0xff]
        %v144 = vld [vmem:[%s118 + $0x20] sm:$0xff]
        %v145 = vld [vmem:[%s118 + $0x28] sm:$0xff]
        %v146 = vld [vmem:[%s118 + $0x30] sm:$0xff]
        %v147 = vld [vmem:[%s118 + $0x38] sm:$0xff]
        %v148 = vld [vmem:[%s118 + $0x40] sm:$0xff]
        %v149 = vld [vmem:[%s118 + $0x48] sm:$0xff]
        %v150 = vld [vmem:[%s118 + $0x50] sm:$0xff]
        %v151 = vld [vmem:[%s118 + $0x58] sm:$0xff]
        %v152 = vld [vmem:[%s118 + $0x60] sm:$0xff]
        %v153 = vld [vmem:[%s118 + $0x68] sm:$0xff]
        %v154 = vld [vmem:[%s118 + $0x70] sm:$0xff]
        %v155 = vld [vmem:[%s118 + $0x78] sm:$0xff]
        %v156 = vld [vmem:[%s118 + $0x80] sm:$0xff]
        %v157 = vld [vmem:[%s118 + $0x88] sm:$0xff]
        %v158 = vld [vmem:[%s118 + $0x90] sm:$0xff]
        %v159 = vld [vmem:[%s118 + $0x98] sm:$0xff]
        %v160 = vld [vmem:[%s118 + $0xa0] sm:$0xff]
        %v161 = vld [vmem:[%s118 + $0xa8] sm:$0xff]
        %v162 = vld [vmem:[%s118 + $0xb0] sm:$0xff]
        %v163 = vld [vmem:[%s118 + $0xb8] sm:$0xff]
        %v164 = vld [vmem:[%s118 + $0xc0] sm:$0xff]
        %v165 = vld [vmem:[%s118 + $0xc8] sm:$0xff]
        %v166 = vld [vmem:[%s118 + $0xd0] sm:$0xff]
        %v167 = vld [vmem:[%s118 + $0xd8] sm:$0xff]
        %v168 = vld [vmem:[%s118 + $0xe0] sm:$0xff]
        %v169 = vld [vmem:[%s118 + $0xe8] sm:$0xff]
        %v170 = vld [vmem:[%s118 + $0xf0] sm:$0xff]
        %v171 = vld [vmem:[%s118 + $0xf8] sm:$0xff]
        %v172 = vld [vmem:[%s118 + $0x100] sm:$0xff]
        %v173 = vld [vmem:[%s118 + $0x108] sm:$0xff]
        %v174 = vld [vmem:[%s118 + $0x110] sm:$0xff]
        %v175 = vld [vmem:[%s118 + $0x118] sm:$0xff]
        %v176 = vld [vmem:[%s118 + $0x120] sm:$0xff]
        %v177 = vld [vmem:[%s118 + $0x128] sm:$0xff]
        %v178 = vld [vmem:[%s118 + $0x130] sm:$0xff]
        %v179 = vld [vmem:[%s118 + $0x138] sm:$0xff]
        %v180 = vld [vmem:[%s118 + $0x140] sm:$0xff]
        %v181 = vld [vmem:[%s118 + $0x148] sm:$0xff]
        %v182 = vld [vmem:[%s118 + $0x150] sm:$0xff]
        %v183 = vld [vmem:[%s118 + $0x158] sm:$0xff]
        %v184 = vld [vmem:[%s118 + $0x160] sm:$0xff]
        %v185 = vld [vmem:[%s118 + $0x168] sm:$0xff]
        %v186 = vld [vmem:[%s118 + $0x170] sm:$0xff]
        %v187 = vld [vmem:[%s118 + $0x178] sm:$0xff]
        %v188 = vld [vmem:[%s118 + $0x180] sm:$0xff]
        %v189 = vld [vmem:[%s118 + $0x188] sm:$0xff]
        %v190 = vld [vmem:[%s118 + $0x190] sm:$0xff]
        %v191 = vld [vmem:[%s118 + $0x198] sm:$0xff]
        %v192 = vld [vmem:[%s118 + $0x1a0] sm:$0xff]
        %v193 = vld [vmem:[%s118 + $0x1a8] sm:$0xff]
        %v194 = vld [vmem:[%s118 + $0x1b0] sm:$0xff]
        %v195 = vld [vmem:[%s118 + $0x1b8] sm:$0xff]
        %v196 = vld [vmem:[%s118 + $0x1c0] sm:$0xff]
        %v197 = vld [vmem:[%s118 + $0x1c8] sm:$0xff]
        %v198 = vld [vmem:[%s118 + $0x1d0] sm:$0xff]
        %v199 = vld [vmem:[%s118 + $0x1d8] sm:$0xff]
        %v200 = vld [vmem:[%s118 + $0x1e0] sm:$0xff]
        %v201 = vld [vmem:[%s118 + $0x1e8] sm:$0xff]
        %v202 = vld [vmem:[%s118 + $0x1f0] sm:$0xff]
        %v203 = vld [vmem:[%s118 + $0x1f8] sm:$0xff]
        %v204 = vld [vmem:[%s118 + $0x200] sm:$0xff]
        %v205 = vld [vmem:[%s118 + $0x208] sm:$0xff]
        %v206 = vld [vmem:[%s118 + $0x210] sm:$0xff]
        %v207 = vld [vmem:[%s118 + $0x218] sm:$0xff]
        %v208 = vld [vmem:[%s118 + $0x220] sm:$0xff]
        %v209 = vld [vmem:[%s118 + $0x228] sm:$0xff]
        %v210 = vld [vmem:[%s118 + $0x230] sm:$0xff]
        %v211 = vld [vmem:[%s118 + $0x238] sm:$0xff]
        %v212 = vld [vmem:[%s118 + $0x240] sm:$0xff]
        %v213 = vld [vmem:[%s118 + $0x248] sm:$0xff]
        %v214 = vld [vmem:[%s118 + $0x250] sm:$0xff]
        %v215 = vld [vmem:[%s118 + $0x258] sm:$0xff]
        %v216 = vld [vmem:[%s118 + $0x260] sm:$0xff]
        %v217 = vld [vmem:[%s118 + $0x268] sm:$0xff]
        %v218 = vld [vmem:[%s118 + $0x270] sm:$0xff]
        %v219 = vld [vmem:[%s118 + $0x278] sm:$0xff]
        %v220 = vld [vmem:[%s118 + $0x280] sm:$0xff]
        %v221 = vld [vmem:[%s118 + $0x288] sm:$0xff]
        %v222 = vld [vmem:[%s118 + $0x290] sm:$0xff]
        %v223 = vld [vmem:[%s118 + $0x298] sm:$0xff]
        %v224 = vld [vmem:[%s118 + $0x2a0] sm:$0xff]
        %v225 = vld [vmem:[%s118 + $0x2a8] sm:$0xff]
        %v226 = vld [vmem:[%s118 + $0x2b0] sm:$0xff]
        %v227 = vld [vmem:[%s118 + $0x2b8] sm:$0xff]
        %v228 = vld [vmem:[%s118 + $0x2c0] sm:$0xff]
        %v229 = vld [vmem:[%s118 + $0x2c8] sm:$0xff]
        %v230 = vld [vmem:[%s118 + $0x2d0] sm:$0xff]
        %v231 = vld [vmem:[%s118 + $0x2d8] sm:$0xff]
        %v232 = vld [vmem:[%s118 + $0x2e0] sm:$0xff]
        %v233 = vld [vmem:[%s118 + $0x2e8] sm:$0xff]
        %v234 = vld [vmem:[%s118 + $0x2f0] sm:$0xff]
        %v235 = vld [vmem:[%s118 + $0x2f8] sm:$0xff]
        %v236 = vld [vmem:[%s118 + $0x300] sm:$0xff]
        %v237 = vld [vmem:[%s118 + $0x308] sm:$0xff]
        %v238 = vld [vmem:[%s118 + $0x310] sm:$0xff]
        %v239 = vld [vmem:[%s118 + $0x318] sm:$0xff]
        %v240 = vld [vmem:[%s118 + $0x320] sm:$0xff]
        %v241 = vld [vmem:[%s118 + $0x328] sm:$0xff]
        %v242 = vld [vmem:[%s118 + $0x330] sm:$0xff]
        %v243 = vld [vmem:[%s118 + $0x338] sm:$0xff]
        %v244 = vld [vmem:[%s118 + $0x340] sm:$0xff]
        %v245 = vld [vmem:[%s118 + $0x348] sm:$0xff]
        %v246 = vld [vmem:[%s118 + $0x350] sm:$0xff]
        %v247 = vld [vmem:[%s118 + $0x358] sm:$0xff]
        %v248 = vld [vmem:[%s118 + $0x360] sm:$0xff]
        %v249 = vld [vmem:[%s118 + $0x368] sm:$0xff]
        %v250 = vld [vmem:[%s118 + $0x370] sm:$0xff]
        %v251 = vld [vmem:[%s118 + $0x378] sm:$0xff]
        %v252 = vld [vmem:[%s118 + $0x380] sm:$0xff]
        %v253 = vld [vmem:[%s118 + $0x388] sm:$0xff]
        %v254 = vld [vmem:[%s118 + $0x390] sm:$0xff]
        %v255 = vld [vmem:[%s118 + $0x398] sm:$0xff]
        %v256 = vld [vmem:[%s118 + $0x3a0] sm:$0xff]
        %v257 = vld [vmem:[%s118 + $0x3a8] sm:$0xff]
        %v258 = vld [vmem:[%s118 + $0x3b0] sm:$0xff]
        %v259 = vld [vmem:[%s118 + $0x3b8] sm:$0xff]
        %v260 = vld [vmem:[%s118 + $0x3c0] sm:$0xff]
        %v261 = vld [vmem:[%s118 + $0x3c8] sm:$0xff]
        %v262 = vld [vmem:[%s118 + $0x3d0] sm:$0xff]
        %v263 = vld [vmem:[%s118 + $0x3d8] sm:$0xff]
        %v264 = vld [vmem:[%s118 + $0x3e0] sm:$0xff]
        %v265 = vld [vmem:[%s118 + $0x3e8] sm:$0xff]
        %v266 = vld [vmem:[%s118 + $0x3f0] sm:$0xff]
        %v267 = vld [vmem:[%s118 + $0x3f8] sm:$0xff]
        %v268 = vld [vmem:[%s118 + $0x400] sm:$0xff]
        %v269 = vld [vmem:[%s118 + $0x408] sm:$0xff]
        %v270 = vld [vmem:[%s118 + $0x410] sm:$0xff]
        %v271 = vld [vmem:[%s118 + $0x418] sm:$0xff]
        %v272 = vld [vmem:[%s118 + $0x420] sm:$0xff]
        %v273 = vld [vmem:[%s118 + $0x428] sm:$0xff]
        %v274 = vld [vmem:[%s118 + $0x430] sm:$0xff]
        %v275 = vld [vmem:[%s118 + $0x438] sm:$0xff]
        %v276 = vld [vmem:[%s118 + $0x440] sm:$0xff]
        %v277 = vld [vmem:[%s118 + $0x448] sm:$0xff]
        %v278 = vld [vmem:[%s118 + $0x450] sm:$0xff]
        %v279 = vld [vmem:[%s118 + $0x458] sm:$0xff]
        %v280 = vld [vmem:[%s118 + $0x460] sm:$0xff]
        %v281 = vld [vmem:[%s118 + $0x468] sm:$0xff]
        %v282 = vld [vmem:[%s118 + $0x470] sm:$0xff]
        %v283 = vld [vmem:[%s118 + $0x478] sm:$0xff]
        %v284 = vld [vmem:[%s118 + $0x480] sm:$0xff]
        %v285 = vld [vmem:[%s118 + $0x488] sm:$0xff]
        %v286 = vld [vmem:[%s118 + $0x490] sm:$0xff]
        %v287 = vld [vmem:[%s118 + $0x498] sm:$0xff]
        %v288 = vld [vmem:[%s118 + $0x4a0] sm:$0xff]
        %v289 = vld [vmem:[%s118 + $0x4a8] sm:$0xff]
        %v290 = vld [vmem:[%s118 + $0x4b0] sm:$0xff]
        %v291 = vld [vmem:[%s118 + $0x4b8] sm:$0xff]
        %v292 = vld [vmem:[%s118 + $0x4c0] sm:$0xff]
        %v293 = vld [vmem:[%s118 + $0x4c8] sm:$0xff]
        %v294 = vld [vmem:[%s118 + $0x4d0] sm:$0xff]
        %v295 = vld [vmem:[%s118 + $0x4d8] sm:$0xff]
        %v296 = vld [vmem:[%s118 + $0x4e0] sm:$0xff]
        %v297 = vld [vmem:[%s118 + $0x4e8] sm:$0xff]
        %v298 = vld [vmem:[%s118 + $0x4f0] sm:$0xff]
        %v299 = vld [vmem:[%s118 + $0x4f8] sm:$0xff]
        %v300 = vld [vmem:[%s118 + $0x500] sm:$0xff]
        %v301 = vld [vmem:[%s118 + $0x508] sm:$0xff]
        %v302 = vld [vmem:[%s118 + $0x510] sm:$0xff]
        %v303 = vld [vmem:[%s118 + $0x518] sm:$0xff]
        %v304 = vld [vmem:[%s118 + $0x520] sm:$0xff]
        %v305 = vld [vmem:[%s118 + $0x528] sm:$0xff]
        %v306 = vld [vmem:[%s118 + $0x530] sm:$0xff]
        %v307 = vld [vmem:[%s118 + $0x538] sm:$0xff]
        %v308 = vld [vmem:[%s118 + $0x540] sm:$0xff]
        %v309 = vld [vmem:[%s118 + $0x548] sm:$0xff]
        %v310 = vld [vmem:[%s118 + $0x550] sm:$0xff]
        %v311 = vld [vmem:[%s118 + $0x558] sm:$0xff]
        %v312 = vld [vmem:[%s118 + $0x560] sm:$0xff]
        %v313 = vld [vmem:[%s118 + $0x568] sm:$0xff]
        %v314 = vld [vmem:[%s118 + $0x570] sm:$0xff]
        %v315 = vld [vmem:[%s118 + $0x578] sm:$0xff]
        %v316 = vld [vmem:[%s118 + $0x580] sm:$0xff]
        %v317 = vld [vmem:[%s118 + $0x588] sm:$0xff]
        %v318 = vld [vmem:[%s118 + $0x590] sm:$0xff]
        %v319 = vld [vmem:[%s118 + $0x598] sm:$0xff]
        %v320 = vld [vmem:[%s118 + $0x5a0] sm:$0xff]
        %v321 = vld [vmem:[%s118 + $0x5a8] sm:$0xff]
        %v322 = vld [vmem:[%s118 + $0x5b0] sm:$0xff]
        %v323 = vld [vmem:[%s118 + $0x5b8] sm:$0xff]
        %v324 = vld [vmem:[%s118 + $0x5c0] sm:$0xff]
        %v325 = vld [vmem:[%s118 + $0x5c8] sm:$0xff]
        %v326 = vld [vmem:[%s118 + $0x5d0] sm:$0xff]
        %v327 = vld [vmem:[%s118 + $0x5d8] sm:$0xff]
        %v328 = vld [vmem:[%s118 + $0x5e0] sm:$0xff]
        %v329 = vld [vmem:[%s118 + $0x5e8] sm:$0xff]
        %v330 = vld [vmem:[%s118 + $0x5f0] sm:$0xff]
        %v331 = vld [vmem:[%s118 + $0x5f8] sm:$0xff]
        %v332 = vld [vmem:[%s118 + $0x600] sm:$0xff]
        %v333 = vld [vmem:[%s118 + $0x608] sm:$0xff]
        %v334 = vld [vmem:[%s118 + $0x610] sm:$0xff]
        %v335 = vld [vmem:[%s118 + $0x618] sm:$0xff]
        %v336 = vld [vmem:[%s118 + $0x620] sm:$0xff]
        %v337 = vld [vmem:[%s118 + $0x628] sm:$0xff]
        %v338 = vld [vmem:[%s118 + $0x630] sm:$0xff]
        %v339 = vld [vmem:[%s118 + $0x638] sm:$0xff]
        %v340 = vld [vmem:[%s118 + $0x640] sm:$0xff]
        %v341 = vld [vmem:[%s118 + $0x648] sm:$0xff]
        %v342 = vld [vmem:[%s118 + $0x650] sm:$0xff]
        %v343 = vld [vmem:[%s118 + $0x658] sm:$0xff]
        %v344 = vld [vmem:[%s118 + $0x660] sm:$0xff]
        %v345 = vld [vmem:[%s118 + $0x668] sm:$0xff]
        %v346 = vld [vmem:[%s118 + $0x670] sm:$0xff]
        %v347 = vld [vmem:[%s118 + $0x678] sm:$0xff]
        %v348 = vld [vmem:[%s118 + $0x680] sm:$0xff]
        %v349 = vld [vmem:[%s118 + $0x688] sm:$0xff]
        %v350 = vld [vmem:[%s118 + $0x690] sm:$0xff]
        %v351 = vld [vmem:[%s118 + $0x698] sm:$0xff]
        %v352 = vld [vmem:[%s118 + $0x6a0] sm:$0xff]
        %v353 = vld [vmem:[%s118 + $0x6a8] sm:$0xff]
        %v354 = vld [vmem:[%s118 + $0x6b0] sm:$0xff]
        %v355 = vld [vmem:[%s118 + $0x6b8] sm:$0xff]
        %v356 = vld [vmem:[%s118 + $0x6c0] sm:$0xff]
        %v357 = vld [vmem:[%s118 + $0x6c8] sm:$0xff]
        %v358 = vld [vmem:[%s118 + $0x6d0] sm:$0xff]
        %v359 = vld [vmem:[%s118 + $0x6d8] sm:$0xff]
        %v360 = vld [vmem:[%s118 + $0x6e0] sm:$0xff]
        %v361 = vld [vmem:[%s118 + $0x6e8] sm:$0xff]
        %v362 = vld [vmem:[%s118 + $0x6f0] sm:$0xff]
        %v363 = vld [vmem:[%s118 + $0x6f8] sm:$0xff]
        %v364 = vld [vmem:[%s118 + $0x700] sm:$0xff]
        %v365 = vld [vmem:[%s118 + $0x708] sm:$0xff]
        %v366 = vld [vmem:[%s118 + $0x710] sm:$0xff]
        %v367 = vld [vmem:[%s118 + $0x718] sm:$0xff]
        %v368 = vld [vmem:[%s118 + $0x720] sm:$0xff]
        %v369 = vld [vmem:[%s118 + $0x728] sm:$0xff]
        %v370 = vld [vmem:[%s118 + $0x730] sm:$0xff]
        %v371 = vld [vmem:[%s118 + $0x738] sm:$0xff]
        %v372 = vld [vmem:[%s118 + $0x740] sm:$0xff]
        %v373 = vld [vmem:[%s118 + $0x748] sm:$0xff]
        %v374 = vld [vmem:[%s118 + $0x750] sm:$0xff]
        %v375 = vld [vmem:[%s118 + $0x758] sm:$0xff]
        %v376 = vld [vmem:[%s118 + $0x760] sm:$0xff]
        %v377 = vld [vmem:[%s118 + $0x768] sm:$0xff]
        %v378 = vld [vmem:[%s118 + $0x770] sm:$0xff]
        %v379 = vld [vmem:[%s118 + $0x778] sm:$0xff]
        %v380 = vld [vmem:[%s118 + $0x780] sm:$0xff]
        %v381 = vld [vmem:[%s118 + $0x788] sm:$0xff]
        %v382 = vld [vmem:[%s118 + $0x790] sm:$0xff]
        %v383 = vld [vmem:[%s118 + $0x798] sm:$0xff]
        %v384 = vld [vmem:[%s118 + $0x7a0] sm:$0xff]
        %v385 = vld [vmem:[%s118 + $0x7a8] sm:$0xff]
        %v386 = vld [vmem:[%s118 + $0x7b0] sm:$0xff]
        %v387 = vld [vmem:[%s118 + $0x7b8] sm:$0xff]
        %v388 = vld [vmem:[%s118 + $0x7c0] sm:$0xff]
        %v389 = vld [vmem:[%s118 + $0x7c8] sm:$0xff]
        %v390 = vld [vmem:[%s118 + $0x7d0] sm:$0xff]
        %v391 = vld [vmem:[%s118 + $0x7d8] sm:$0xff]
        %v392 = vld [vmem:[%s118 + $0x7e0] sm:$0xff]
        %v393 = vld [vmem:[%s118 + $0x7e8] sm:$0xff]
        %v394 = vld [vmem:[%s118 + $0x7f0] sm:$0xff]
        %v395 = vld [vmem:[%s118 + $0x7f8] sm:$0xff]
        %v396 = vld [vmem:[%s118 + $0x800] sm:$0xff]
        %v397 = vld [vmem:[%s118 + $0x808] sm:$0xff]
        %v398 = vld [vmem:[%s118 + $0x810] sm:$0xff]
        %v399 = vld [vmem:[%s118 + $0x818] sm:$0xff]
        %v400 = vld [vmem:[%s118 + $0x820] sm:$0xff]
        %v401 = vld [vmem:[%s118 + $0x828] sm:$0xff]
        %v402 = vld [vmem:[%s118 + $0x830] sm:$0xff]
        %v403 = vld [vmem:[%s118 + $0x838] sm:$0xff]
        %v404 = vld [vmem:[%s118 + $0x840] sm:$0xff]
        %v405 = vld [vmem:[%s118 + $0x848] sm:$0xff]
        %v406 = vld [vmem:[%s118 + $0x850] sm:$0xff]
        %v407 = vld [vmem:[%s118 + $0x858] sm:$0xff]
        %v408 = vld [vmem:[%s118 + $0x860] sm:$0xff]
        %v409 = vld [vmem:[%s118 + $0x868] sm:$0xff]
        %v410 = vld [vmem:[%s118 + $0x870] sm:$0xff]
        %v411 = vld [vmem:[%s118 + $0x878] sm:$0xff]
        %v412 = vld [vmem:[%s118 + $0x880] sm:$0xff]
        %v413 = vld [vmem:[%s118 + $0x888] sm:$0xff]
        %v414 = vld [vmem:[%s118 + $0x890] sm:$0xff]
        %v415 = vld [vmem:[%s118 + $0x898] sm:$0xff]
        %v416 = vld [vmem:[%s118 + $0x8a0] sm:$0xff]
        %v417 = vld [vmem:[%s118 + $0x8a8] sm:$0xff]
        %v418 = vld [vmem:[%s118 + $0x8b0] sm:$0xff]
        %v419 = vld [vmem:[%s118 + $0x8b8] sm:$0xff]
        %v420 = vld [vmem:[%s118 + $0x8c0] sm:$0xff]
        %v421 = vld [vmem:[%s118 + $0x8c8] sm:$0xff]
        %v422 = vld [vmem:[%s118 + $0x8d0] sm:$0xff]
        %v423 = vld [vmem:[%s118 + $0x8d8] sm:$0xff]
        %v424 = vld [vmem:[%s118 + $0x8e0] sm:$0xff]
        %v425 = vld [vmem:[%s118 + $0x8e8] sm:$0xff]
        %v426 = vld [vmem:[%s118 + $0x8f0] sm:$0xff]
        %v427 = vld [vmem:[%s118 + $0x8f8] sm:$0xff]
        %v428 = vld [vmem:[%s118 + $0x900] sm:$0xff]
        %v429 = vld [vmem:[%s118 + $0x908] sm:$0xff]
        %v430 = vld [vmem:[%s118 + $0x910] sm:$0xff]
        %v431 = vld [vmem:[%s118 + $0x918] sm:$0xff]
        %v432 = vld [vmem:[%s118 + $0x920] sm:$0xff]
        %v433 = vld [vmem:[%s118 + $0x928] sm:$0xff]
        %v434 = vld [vmem:[%s118 + $0x930] sm:$0xff]
        %v435 = vld [vmem:[%s118 + $0x938] sm:$0xff]
        %v436 = vld [vmem:[%s118 + $0x940] sm:$0xff]
        %v437 = vld [vmem:[%s118 + $0x948] sm:$0xff]
        %v438 = vld [vmem:[%s118 + $0x950] sm:$0xff]
        %v439 = vld [vmem:[%s118 + $0x958] sm:$0xff]
        %v440 = vld [vmem:[%s118 + $0x960] sm:$0xff]
        %v441 = vld [vmem:[%s118 + $0x968] sm:$0xff]
        %v442 = vld [vmem:[%s118 + $0x970] sm:$0xff]
        %v443 = vld [vmem:[%s118 + $0x978] sm:$0xff]
        %v444 = vld [vmem:[%s118 + $0x980] sm:$0xff]
        %v445 = vld [vmem:[%s118 + $0x988] sm:$0xff]
        %v446 = vld [vmem:[%s118 + $0x990] sm:$0xff]
        %v447 = vld [vmem:[%s118 + $0x998] sm:$0xff]
        %v448 = vld [vmem:[%s118 + $0x9a0] sm:$0xff]
        %v449 = vld [vmem:[%s118 + $0x9a8] sm:$0xff]
        %v450 = vld [vmem:[%s118 + $0x9b0] sm:$0xff]
        %v451 = vld [vmem:[%s118 + $0x9b8] sm:$0xff]
        %v452 = vld [vmem:[%s118 + $0x9c0] sm:$0xff]
        %v453 = vld [vmem:[%s118 + $0x9c8] sm:$0xff]
        %v454 = vld [vmem:[%s118 + $0x9d0] sm:$0xff]
        %v455 = vld [vmem:[%s118 + $0x9d8] sm:$0xff]
        %v456 = vld [vmem:[%s118 + $0x9e0] sm:$0xff]
        %v457 = vld [vmem:[%s118 + $0x9e8] sm:$0xff]
        %v458 = vld [vmem:[%s118 + $0x9f0] sm:$0xff]
        %v459 = vld [vmem:[%s118 + $0x9f8] sm:$0xff]
        %v460 = vld [vmem:[%s118 + $0xa00] sm:$0xff]
        %v461 = vld [vmem:[%s118 + $0xa08] sm:$0xff]
        %v462 = vld [vmem:[%s118 + $0xa10] sm:$0xff]
        %v463 = vld [vmem:[%s118 + $0xa18] sm:$0xff]
        %v464 = vld [vmem:[%s118 + $0xa20] sm:$0xff]
        %v465 = vld [vmem:[%s118 + $0xa28] sm:$0xff]
        %v466 = vld [vmem:[%s118 + $0xa30] sm:$0xff]
        %v467 = vld [vmem:[%s118 + $0xa38] sm:$0xff]
        %v468 = vld [vmem:[%s118 + $0xa40] sm:$0xff]
        %v469 = vld [vmem:[%s118 + $0xa48] sm:$0xff]
        %v470 = vld [vmem:[%s118 + $0xa50] sm:$0xff]
        %v471 = vld [vmem:[%s118 + $0xa58] sm:$0xff]
        %v472 = vld [vmem:[%s118 + $0xa60] sm:$0xff]
        %v473 = vld [vmem:[%s118 + $0xa68] sm:$0xff]
        %v474 = vld [vmem:[%s118 + $0xa70] sm:$0xff]
        %v475 = vld [vmem:[%s118 + $0xa78] sm:$0xff]
        %v476 = vld [vmem:[%s118 + $0xa80] sm:$0xff]
        %v477 = vld [vmem:[%s118 + $0xa88] sm:$0xff]
        %v478 = vld [vmem:[%s118 + $0xa90] sm:$0xff]
        %v479 = vld [vmem:[%s118 + $0xa98] sm:$0xff]
        %v480 = vld [vmem:[%s118 + $0xaa0] sm:$0xff]
        %v481 = vld [vmem:[%s118 + $0xaa8] sm:$0xff]
        %v482 = vld [vmem:[%s118 + $0xab0] sm:$0xff]
        %v483 = vld [vmem:[%s118 + $0xab8] sm:$0xff]
        %v484 = vld [vmem:[%s118 + $0xac0] sm:$0xff]
        %v485 = vld [vmem:[%s118 + $0xac8] sm:$0xff]
        %v486 = vld [vmem:[%s118 + $0xad0] sm:$0xff]
        %v487 = vld [vmem:[%s118 + $0xad8] sm:$0xff]
        %v488 = vld [vmem:[%s118 + $0xae0] sm:$0xff]
        %v489 = vld [vmem:[%s118 + $0xae8] sm:$0xff]
        %v490 = vld [vmem:[%s118 + $0xaf0] sm:$0xff]
        %v491 = vld [vmem:[%s118 + $0xaf8] sm:$0xff]
        %v492 = vld [vmem:[%s118 + $0xb00] sm:$0xff]
        %v493 = vld [vmem:[%s118 + $0xb08] sm:$0xff]
        %v494 = vld [vmem:[%s118 + $0xb10] sm:$0xff]
        %v495 = vld [vmem:[%s118 + $0xb18] sm:$0xff]
        %v496 = vld [vmem:[%s118 + $0xb20] sm:$0xff]
        %v497 = vld [vmem:[%s118 + $0xb28] sm:$0xff]
        %v498 = vld [vmem:[%s118 + $0xb30] sm:$0xff]
        %v499 = vld [vmem:[%s118 + $0xb38] sm:$0xff]
        %v500 = vld [vmem:[%s118 + $0xb40] sm:$0xff]
        %v501 = vld [vmem:[%s118 + $0xb48] sm:$0xff]
        %v502 = vld [vmem:[%s118 + $0xb50] sm:$0xff]
        %v503 = vld [vmem:[%s118 + $0xb58] sm:$0xff]
        %v504 = vld [vmem:[%s118 + $0xb60] sm:$0xff]
        %v505 = vld [vmem:[%s118 + $0xb68] sm:$0xff]
        %v506 = vld [vmem:[%s118 + $0xb70] sm:$0xff]
        %v507 = vld [vmem:[%s118 + $0xb78] sm:$0xff]
        %v508 = vld [vmem:[%s118 + $0xb80] sm:$0xff]
        %v509 = vld [vmem:[%s118 + $0xb88] sm:$0xff]
        %v510 = vld [vmem:[%s118 + $0xb90] sm:$0xff]
        %v511 = vld [vmem:[%s118 + $0xb98] sm:$0xff]
        %v512 = vld [vmem:[%s118 + $0xba0] sm:$0xff]
        %v513 = vld [vmem:[%s118 + $0xba8] sm:$0xff]
        %v514 = vld [vmem:[%s118 + $0xbb0] sm:$0xff]
        %v515 = vld [vmem:[%s118 + $0xbb8] sm:$0xff]
        %v516 = vld [vmem:[%s118 + $0xbc0] sm:$0xff]
        %v517 = vld [vmem:[%s118 + $0xbc8] sm:$0xff]
        %v518 = vld [vmem:[%s118 + $0xbd0] sm:$0xff]
        %v519 = vld [vmem:[%s118 + $0xbd8] sm:$0xff]
        %v520 = vld [vmem:[%s118 + $0xbe0] sm:$0xff]
        %v521 = vld [vmem:[%s118 + $0xbe8] sm:$0xff]
        %v522 = vld [vmem:[%s118 + $0xbf0] sm:$0xff]
        %v523 = vld [vmem:[%s118 + $0xbf8] sm:$0xff]
        %v524 = vld [vmem:[%s118 + $0xc00] sm:$0xff]
        %v525 = vld [vmem:[%s118 + $0xc08] sm:$0xff]
        %v526 = vld [vmem:[%s118 + $0xc10] sm:$0xff]
        %v527 = vld [vmem:[%s118 + $0xc18] sm:$0xff]
        %v528 = vld [vmem:[%s118 + $0xc20] sm:$0xff]
        %v529 = vld [vmem:[%s118 + $0xc28] sm:$0xff]
        %v530 = vld [vmem:[%s118 + $0xc30] sm:$0xff]
        %v531 = vld [vmem:[%s118 + $0xc38] sm:$0xff]
        %v532 = vld [vmem:[%s118 + $0xc40] sm:$0xff]
        %v533 = vld [vmem:[%s118 + $0xc48] sm:$0xff]
        %v534 = vld [vmem:[%s118 + $0xc50] sm:$0xff]
        %v535 = vld [vmem:[%s118 + $0xc58] sm:$0xff]
        %v536 = vld [vmem:[%s118 + $0xc60] sm:$0xff]
        %v537 = vld [vmem:[%s118 + $0xc68] sm:$0xff]
        %v538 = vld [vmem:[%s118 + $0xc70] sm:$0xff]
        %v539 = vld [vmem:[%s118 + $0xc78] sm:$0xff]
        %v540 = vld [vmem:[%s118 + $0xc80] sm:$0xff]
        %v541 = vld [vmem:[%s118 + $0xc88] sm:$0xff]
        %v542 = vld [vmem:[%s118 + $0xc90] sm:$0xff]
        %v543 = vld [vmem:[%s118 + $0xc98] sm:$0xff]
        %v544 = vld [vmem:[%s118 + $0xca0] sm:$0xff]
        %v545 = vld [vmem:[%s118 + $0xca8] sm:$0xff]
        %v546 = vld [vmem:[%s118 + $0xcb0] sm:$0xff]
        %v547 = vld [vmem:[%s118 + $0xcb8] sm:$0xff]
        %v548 = vld [vmem:[%s118 + $0xcc0] sm:$0xff]
        %v549 = vld [vmem:[%s118 + $0xcc8] sm:$0xff]
        %v550 = vld [vmem:[%s118 + $0xcd0] sm:$0xff]
        %v551 = vld [vmem:[%s118 + $0xcd8] sm:$0xff]
        %v552 = vld [vmem:[%s118 + $0xce0] sm:$0xff]
        %v553 = vld [vmem:[%s118 + $0xce8] sm:$0xff]
        %v554 = vld [vmem:[%s118 + $0xcf0] sm:$0xff]
        %v555 = vld [vmem:[%s118 + $0xcf8] sm:$0xff]
        %v556 = vld [vmem:[%s118 + $0xd00] sm:$0xff]
        %v557 = vld [vmem:[%s118 + $0xd08] sm:$0xff]
        %v558 = vld [vmem:[%s118 + $0xd10] sm:$0xff]
        %v559 = vld [vmem:[%s118 + $0xd18] sm:$0xff]
        %v560 = vld [vmem:[%s118 + $0xd20] sm:$0xff]
        %v561 = vld [vmem:[%s118 + $0xd28] sm:$0xff]
        %v562 = vld [vmem:[%s118 + $0xd30] sm:$0xff]
        %v563 = vld [vmem:[%s118 + $0xd38] sm:$0xff]
        %v564 = vld [vmem:[%s118 + $0xd40] sm:$0xff]
        %v565 = vld [vmem:[%s118 + $0xd48] sm:$0xff]
        %v566 = vld [vmem:[%s118 + $0xd50] sm:$0xff]
        %v567 = vld [vmem:[%s118 + $0xd58] sm:$0xff]
        %v568 = vld [vmem:[%s118 + $0xd60] sm:$0xff]
        %v569 = vld [vmem:[%s118 + $0xd68] sm:$0xff]
        %v570 = vld [vmem:[%s118 + $0xd70] sm:$0xff]
        %v571 = vld [vmem:[%s118 + $0xd78] sm:$0xff]
        %v572 = vld [vmem:[%s118 + $0xd80] sm:$0xff]
        %v573 = vld [vmem:[%s118 + $0xd88] sm:$0xff]
        %v574 = vld [vmem:[%s118 + $0xd90] sm:$0xff]
        %v575 = vld [vmem:[%s118 + $0xd98] sm:$0xff]
        %v576 = vld [vmem:[%s118 + $0xda0] sm:$0xff]
        %v577 = vld [vmem:[%s118 + $0xda8] sm:$0xff]
        %v578 = vld [vmem:[%s118 + $0xdb0] sm:$0xff]
        %v579 = vld [vmem:[%s118 + $0xdb8] sm:$0xff]
        %v580 = vld [vmem:[%s118 + $0xdc0] sm:$0xff]
        %v581 = vld [vmem:[%s118 + $0xdc8] sm:$0xff]
        %v582 = vld [vmem:[%s118 + $0xdd0] sm:$0xff]
        %v583 = vld [vmem:[%s118 + $0xdd8] sm:$0xff]
        %v584 = vld [vmem:[%s118 + $0xde0] sm:$0xff]
        %v585 = vld [vmem:[%s118 + $0xde8] sm:$0xff]
        %v586 = vld [vmem:[%s118 + $0xdf0] sm:$0xff]
        %v587 = vld [vmem:[%s118 + $0xdf8] sm:$0xff]
        %v588 = vld [vmem:[%s118 + $0xe00] sm:$0xff]
        %v589 = vld [vmem:[%s118 + $0xe08] sm:$0xff]
        %v590 = vld [vmem:[%s118 + $0xe10] sm:$0xff]
        %v591 = vld [vmem:[%s118 + $0xe18] sm:$0xff]
        %v592 = vld [vmem:[%s118 + $0xe20] sm:$0xff]
        %v593 = vld [vmem:[%s118 + $0xe28] sm:$0xff]
        %v594 = vld [vmem:[%s118 + $0xe30] sm:$0xff]
        %v595 = vld [vmem:[%s118 + $0xe38] sm:$0xff]
        %v596 = vld [vmem:[%s118 + $0xe40] sm:$0xff]
        %v597 = vld [vmem:[%s118 + $0xe48] sm:$0xff]
        %v598 = vld [vmem:[%s118 + $0xe50] sm:$0xff]
        %v599 = vld [vmem:[%s118 + $0xe58] sm:$0xff]
        %v600 = vld [vmem:[%s118 + $0xe60] sm:$0xff]
        %v601 = vld [vmem:[%s118 + $0xe68] sm:$0xff]
        %v602 = vld [vmem:[%s118 + $0xe70] sm:$0xff]
        %v603 = vld [vmem:[%s118 + $0xe78] sm:$0xff]
        %v604 = vld [vmem:[%s118 + $0xe80] sm:$0xff]
        %v605 = vld [vmem:[%s118 + $0xe88] sm:$0xff]
        %v606 = vld [vmem:[%s118 + $0xe90] sm:$0xff]
        %v607 = vld [vmem:[%s118 + $0xe98] sm:$0xff]
        %v608 = vld [vmem:[%s118 + $0xea0] sm:$0xff]
        %v609 = vld [vmem:[%s118 + $0xea8] sm:$0xff]
        %v610 = vld [vmem:[%s118 + $0xeb0] sm:$0xff]
        %v611 = vld [vmem:[%s118 + $0xeb8] sm:$0xff]
        %v612 = vld [vmem:[%s118 + $0xec0] sm:$0xff]
        %v613 = vld [vmem:[%s118 + $0xec8] sm:$0xff]
        %v614 = vld [vmem:[%s118 + $0xed0] sm:$0xff]
        %v615 = vld [vmem:[%s118 + $0xed8] sm:$0xff]
        %v616 = vld [vmem:[%s118 + $0xee0] sm:$0xff]
        %v617 = vld [vmem:[%s118 + $0xee8] sm:$0xff]
        %v618 = vld [vmem:[%s118 + $0xef0] sm:$0xff]
        %v619 = vld [vmem:[%s118 + $0xef8] sm:$0xff]
        %v620 = vld [vmem:[%s118 + $0xf00] sm:$0xff]
        %v621 = vld [vmem:[%s118 + $0xf08] sm:$0xff]
        %v622 = vld [vmem:[%s118 + $0xf10] sm:$0xff]
        %v623 = vld [vmem:[%s118 + $0xf18] sm:$0xff]
        %v624 = vld [vmem:[%s118 + $0xf20] sm:$0xff]
        %v625 = vld [vmem:[%s118 + $0xf28] sm:$0xff]
        %v626 = vld [vmem:[%s118 + $0xf30] sm:$0xff]
        %v627 = vld [vmem:[%s118 + $0xf38] sm:$0xff]
        %v628 = vld [vmem:[%s118 + $0xf40] sm:$0xff]
        %v629 = vld [vmem:[%s118 + $0xf48] sm:$0xff]
        %v630 = vld [vmem:[%s118 + $0xf50] sm:$0xff]
        %v631 = vld [vmem:[%s118 + $0xf58] sm:$0xff]
        %v632 = vld [vmem:[%s118 + $0xf60] sm:$0xff]
        %v633 = vld [vmem:[%s118 + $0xf68] sm:$0xff]
        %v634 = vld [vmem:[%s118 + $0xf70] sm:$0xff]
        %v635 = vld [vmem:[%s118 + $0xf78] sm:$0xff]
        %v636 = vld [vmem:[%s118 + $0xf80] sm:$0xff]
        %v637 = vld [vmem:[%s118 + $0xf88] sm:$0xff]
        %v638 = vld [vmem:[%s118 + $0xf90] sm:$0xff]
        %v639 = vld [vmem:[%s118 + $0xf98] sm:$0xff]
        %v640 = vld [vmem:[%s118 + $0xfa0] sm:$0xff]
        %v641 = vld [vmem:[%s118 + $0xfa8] sm:$0xff]
        %v642 = vld [vmem:[%s118 + $0xfb0] sm:$0xff]
        %v643 = vld [vmem:[%s118 + $0xfb8] sm:$0xff]
        %v644 = vld [vmem:[%s118 + $0xfc0] sm:$0xff]
        %v645 = vld [vmem:[%s118 + $0xfc8] sm:$0xff]
        %v646 = vld [vmem:[%s118 + $0xfd0] sm:$0xff]
        %v647 = vld [vmem:[%s118 + $0xfd8] sm:$0xff]
        %v648 = vld [vmem:[%s118 + $0xfe0] sm:$0xff]
        %v649 = vld [vmem:[%s118 + $0xfe8] sm:$0xff]
        %v650 = vld [vmem:[%s118 + $0xff0] sm:$0xff]
        %v651 = vld [vmem:[%s118 + $0xff8] sm:$0xff]
        %v652 = vmul.f32 %v140, 4.0
        %v653 = vmul.f32 %v141, 4.0
        %v654 = vmul.f32 %v142, 4.0
        %v655 = vmul.f32 %v143, 4.0
        %v656 = vmul.f32 %v144, 4.0
        %v657 = vmul.f32 %v145, 4.0
        %v658 = vmul.f32 %v146, 4.0
        %v659 = vmul.f32 %v147, 4.0
        %v660 = vmul.f32 %v148, 4.0
        %v661 = vmul.f32 %v149, 4.0
        %v662 = vmul.f32 %v150, 4.0
        %v663 = vmul.f32 %v151, 4.0
        %v664 = vmul.f32 %v152, 4.0
        %v665 = vmul.f32 %v153, 4.0
        %v666 = vmul.f32 %v154, 4.0
        %v667 = vmul.f32 %v155, 4.0
        %v668 = vmul.f32 %v156, 4.0
        %v669 = vmul.f32 %v157, 4.0
        %v670 = vmul.f32 %v158, 4.0
        %v671 = vmul.f32 %v159, 4.0
        %v672 = vmul.f32 %v160, 4.0
        %v673 = vmul.f32 %v161, 4.0
        %v674 = vmul.f32 %v162, 4.0
        %v675 = vmul.f32 %v163, 4.0
        %v676 = vmul.f32 %v164, 4.0
        %v677 = vmul.f32 %v165, 4.0
        %v678 = vmul.f32 %v166, 4.0
        %v679 = vmul.f32 %v167, 4.0
        %v680 = vmul.f32 %v168, 4.0
        %v681 = vmul.f32 %v169, 4.0
        %v682 = vmul.f32 %v170, 4.0
        %v683 = vmul.f32 %v171, 4.0
        %v684 = vmul.f32 %v172, 4.0
        %v685 = vmul.f32 %v173, 4.0
        %v686 = vmul.f32 %v174, 4.0
        %v687 = vmul.f32 %v175, 4.0
        %v688 = vmul.f32 %v176, 4.0
        %v689 = vmul.f32 %v177, 4.0
        %v690 = vmul.f32 %v178, 4.0
        %v691 = vmul.f32 %v179, 4.0
        %v692 = vmul.f32 %v180, 4.0
        %v693 = vmul.f32 %v181, 4.0
        %v694 = vmul.f32 %v182, 4.0
        %v695 = vmul.f32 %v183, 4.0
        %v696 = vmul.f32 %v184, 4.0
        %v697 = vmul.f32 %v185, 4.0
        %v698 = vmul.f32 %v186, 4.0
        %v699 = vmul.f32 %v187, 4.0
        %v700 = vmul.f32 %v188, 4.0
        %v701 = vmul.f32 %v189, 4.0
        %v702 = vmul.f32 %v190, 4.0
        %v703 = vmul.f32 %v191, 4.0
        %v704 = vmul.f32 %v192, 4.0
        %v705 = vmul.f32 %v193, 4.0
        %v706 = vmul.f32 %v194, 4.0
        %v707 = vmul.f32 %v195, 4.0
        %v708 = vmul.f32 %v196, 4.0
        %v709 = vmul.f32 %v197, 4.0
        %v710 = vmul.f32 %v198, 4.0
        %v711 = vmul.f32 %v199, 4.0
        %v712 = vmul.f32 %v200, 4.0
        %v713 = vmul.f32 %v201, 4.0
        %v714 = vmul.f32 %v202, 4.0
        %v715 = vmul.f32 %v203, 4.0
        %v716 = vmul.f32 %v204, 4.0
        %v717 = vmul.f32 %v205, 4.0
        %v718 = vmul.f32 %v206, 4.0
        %v719 = vmul.f32 %v207, 4.0
        %v720 = vmul.f32 %v208, 4.0
        %v721 = vmul.f32 %v209, 4.0
        %v722 = vmul.f32 %v210, 4.0
        %v723 = vmul.f32 %v211, 4.0
        %v724 = vmul.f32 %v212, 4.0
        %v725 = vmul.f32 %v213, 4.0
        %v726 = vmul.f32 %v214, 4.0
        %v727 = vmul.f32 %v215, 4.0
        %v728 = vmul.f32 %v216, 4.0
        %v729 = vmul.f32 %v217, 4.0
        %v730 = vmul.f32 %v218, 4.0
        %v731 = vmul.f32 %v219, 4.0
        %v732 = vmul.f32 %v220, 4.0
        %v733 = vmul.f32 %v221, 4.0
        %v734 = vmul.f32 %v222, 4.0
        %v735 = vmul.f32 %v223, 4.0
        %v736 = vmul.f32 %v224, 4.0
        %v737 = vmul.f32 %v225, 4.0
        %v738 = vmul.f32 %v226, 4.0
        %v739 = vmul.f32 %v227, 4.0
        %v740 = vmul.f32 %v228, 4.0
        %v741 = vmul.f32 %v229, 4.0
        %v742 = vmul.f32 %v230, 4.0
        %v743 = vmul.f32 %v231, 4.0
        %v744 = vmul.f32 %v232, 4.0
        %v745 = vmul.f32 %v233, 4.0
        %v746 = vmul.f32 %v234, 4.0
        %v747 = vmul.f32 %v235, 4.0
        %v748 = vmul.f32 %v236, 4.0
        %v749 = vmul.f32 %v237, 4.0
        %v750 = vmul.f32 %v238, 4.0
        %v751 = vmul.f32 %v239, 4.0
        %v752 = vmul.f32 %v240, 4.0
        %v753 = vmul.f32 %v241, 4.0
        %v754 = vmul.f32 %v242, 4.0
        %v755 = vmul.f32 %v243, 4.0
        %v756 = vmul.f32 %v244, 4.0
        %v757 = vmul.f32 %v245, 4.0
        %v758 = vmul.f32 %v246, 4.0
        %v759 = vmul.f32 %v247, 4.0
        %v760 = vmul.f32 %v248, 4.0
        %v761 = vmul.f32 %v249, 4.0
        %v762 = vmul.f32 %v250, 4.0
        %v763 = vmul.f32 %v251, 4.0
        %v764 = vmul.f32 %v252, 4.0
        %v765 = vmul.f32 %v253, 4.0
        %v766 = vmul.f32 %v254, 4.0
        %v767 = vmul.f32 %v255, 4.0
        %v768 = vmul.f32 %v256, 4.0
        %v769 = vmul.f32 %v257, 4.0
        %v770 = vmul.f32 %v258, 4.0
        %v771 = vmul.f32 %v259, 4.0
        %v772 = vmul.f32 %v260, 4.0
        %v773 = vmul.f32 %v261, 4.0
        %v774 = vmul.f32 %v262, 4.0
        %v775 = vmul.f32 %v263, 4.0
        %v776 = vmul.f32 %v264, 4.0
        %v777 = vmul.f32 %v265, 4.0
        %v778 = vmul.f32 %v266, 4.0
        %v779 = vmul.f32 %v267, 4.0
        %v780 = vmul.f32 %v268, 4.0
        %v781 = vmul.f32 %v269, 4.0
        %v782 = vmul.f32 %v270, 4.0
        %v783 = vmul.f32 %v271, 4.0
        %v784 = vmul.f32 %v272, 4.0
        %v785 = vmul.f32 %v273, 4.0
        %v786 = vmul.f32 %v274, 4.0
        %v787 = vmul.f32 %v275, 4.0
        %v788 = vmul.f32 %v276, 4.0
        %v789 = vmul.f32 %v277, 4.0
        %v790 = vmul.f32 %v278, 4.0
        %v791 = vmul.f32 %v279, 4.0
        %v792 = vmul.f32 %v280, 4.0
        %v793 = vmul.f32 %v281, 4.0
        %v794 = vmul.f32 %v282, 4.0
        %v795 = vmul.f32 %v283, 4.0
        %v796 = vmul.f32 %v284, 4.0
        %v797 = vmul.f32 %v285, 4.0
        %v798 = vmul.f32 %v286, 4.0
        %v799 = vmul.f32 %v287, 4.0
        %v800 = vmul.f32 %v288, 4.0
        %v801 = vmul.f32 %v289, 4.0
        %v802 = vmul.f32 %v290, 4.0
        %v803 = vmul.f32 %v291, 4.0
        %v804 = vmul.f32 %v292, 4.0
        %v805 = vmul.f32 %v293, 4.0
        %v806 = vmul.f32 %v294, 4.0
        %v807 = vmul.f32 %v295, 4.0
        %v808 = vmul.f32 %v296, 4.0
        %v809 = vmul.f32 %v297, 4.0
        %v810 = vmul.f32 %v298, 4.0
        %v811 = vmul.f32 %v299, 4.0
        %v812 = vmul.f32 %v300, 4.0
        %v813 = vmul.f32 %v301, 4.0
        %v814 = vmul.f32 %v302, 4.0
        %v815 = vmul.f32 %v303, 4.0
        %v816 = vmul.f32 %v304, 4.0
        %v817 = vmul.f32 %v305, 4.0
        %v818 = vmul.f32 %v306, 4.0
        %v819 = vmul.f32 %v307, 4.0
        %v820 = vmul.f32 %v308, 4.0
        %v821 = vmul.f32 %v309, 4.0
        %v822 = vmul.f32 %v310, 4.0
        %v823 = vmul.f32 %v311, 4.0
        %v824 = vmul.f32 %v312, 4.0
        %v825 = vmul.f32 %v313, 4.0
        %v826 = vmul.f32 %v314, 4.0
        %v827 = vmul.f32 %v315, 4.0
        %v828 = vmul.f32 %v316, 4.0
        %v829 = vmul.f32 %v317, 4.0
        %v830 = vmul.f32 %v318, 4.0
        %v831 = vmul.f32 %v319, 4.0
        %v832 = vmul.f32 %v320, 4.0
        %v833 = vmul.f32 %v321, 4.0
        %v834 = vmul.f32 %v322, 4.0
        %v835 = vmul.f32 %v323, 4.0
        %v836 = vmul.f32 %v324, 4.0
        %v837 = vmul.f32 %v325, 4.0
        %v838 = vmul.f32 %v326, 4.0
        %v839 = vmul.f32 %v327, 4.0
        %v840 = vmul.f32 %v328, 4.0
        %v841 = vmul.f32 %v329, 4.0
        %v842 = vmul.f32 %v330, 4.0
        %v843 = vmul.f32 %v331, 4.0
        %v844 = vmul.f32 %v332, 4.0
        %v845 = vmul.f32 %v333, 4.0
        %v846 = vmul.f32 %v334, 4.0
        %v847 = vmul.f32 %v335, 4.0
        %v848 = vmul.f32 %v336, 4.0
        %v849 = vmul.f32 %v337, 4.0
        %v850 = vmul.f32 %v338, 4.0
        %v851 = vmul.f32 %v339, 4.0
        %v852 = vmul.f32 %v340, 4.0
        %v853 = vmul.f32 %v341, 4.0
        %v854 = vmul.f32 %v342, 4.0
        %v855 = vmul.f32 %v343, 4.0
        %v856 = vmul.f32 %v344, 4.0
        %v857 = vmul.f32 %v345, 4.0
        %v858 = vmul.f32 %v346, 4.0
        %v859 = vmul.f32 %v347, 4.0
        %v860 = vmul.f32 %v348, 4.0
        %v861 = vmul.f32 %v349, 4.0
        %v862 = vmul.f32 %v350, 4.0
        %v863 = vmul.f32 %v351, 4.0
        %v864 = vmul.f32 %v352, 4.0
        %v865 = vmul.f32 %v353, 4.0
        %v866 = vmul.f32 %v354, 4.0
        %v867 = vmul.f32 %v355, 4.0
        %v868 = vmul.f32 %v356, 4.0
        %v869 = vmul.f32 %v357, 4.0
        %v870 = vmul.f32 %v358, 4.0
        %v871 = vmul.f32 %v359, 4.0
        %v872 = vmul.f32 %v360, 4.0
        %v873 = vmul.f32 %v361, 4.0
        %v874 = vmul.f32 %v362, 4.0
        %v875 = vmul.f32 %v363, 4.0
        %v876 = vmul.f32 %v364, 4.0
        %v877 = vmul.f32 %v365, 4.0
        %v878 = vmul.f32 %v366, 4.0
        %v879 = vmul.f32 %v367, 4.0
        %v880 = vmul.f32 %v368, 4.0
        %v881 = vmul.f32 %v369, 4.0
        %v882 = vmul.f32 %v370, 4.0
        %v883 = vmul.f32 %v371, 4.0
        %v884 = vmul.f32 %v372, 4.0
        %v885 = vmul.f32 %v373, 4.0
        %v886 = vmul.f32 %v374, 4.0
        %v887 = vmul.f32 %v375, 4.0
        %v888 = vmul.f32 %v376, 4.0
        %v889 = vmul.f32 %v377, 4.0
        %v890 = vmul.f32 %v378, 4.0
        %v891 = vmul.f32 %v379, 4.0
        %v892 = vmul.f32 %v380, 4.0
        %v893 = vmul.f32 %v381, 4.0
        %v894 = vmul.f32 %v382, 4.0
        %v895 = vmul.f32 %v383, 4.0
        %v896 = vmul.f32 %v384, 4.0
        %v897 = vmul.f32 %v385, 4.0
        %v898 = vmul.f32 %v386, 4.0
        %v899 = vmul.f32 %v387, 4.0
        %v900 = vmul.f32 %v388, 4.0
        %v901 = vmul.f32 %v389, 4.0
        %v902 = vmul.f32 %v390, 4.0
        %v903 = vmul.f32 %v391, 4.0
        %v904 = vmul.f32 %v392, 4.0
        %v905 = vmul.f32 %v393, 4.0
        %v906 = vmul.f32 %v394, 4.0
        %v907 = vmul.f32 %v395, 4.0
        %v908 = vmul.f32 %v396, 4.0
        %v909 = vmul.f32 %v397, 4.0
        %v910 = vmul.f32 %v398, 4.0
        %v911 = vmul.f32 %v399, 4.0
        %v912 = vmul.f32 %v400, 4.0
        %v913 = vmul.f32 %v401, 4.0
        %v914 = vmul.f32 %v402, 4.0
        %v915 = vmul.f32 %v403, 4.0
        %v916 = vmul.f32 %v404, 4.0
        %v917 = vmul.f32 %v405, 4.0
        %v918 = vmul.f32 %v406, 4.0
        %v919 = vmul.f32 %v407, 4.0
        %v920 = vmul.f32 %v408, 4.0
        %v921 = vmul.f32 %v409, 4.0
        %v922 = vmul.f32 %v410, 4.0
        %v923 = vmul.f32 %v411, 4.0
        %v924 = vmul.f32 %v412, 4.0
        %v925 = vmul.f32 %v413, 4.0
        %v926 = vmul.f32 %v414, 4.0
        %v927 = vmul.f32 %v415, 4.0
        %v928 = vmul.f32 %v416, 4.0
        %v929 = vmul.f32 %v417, 4.0
        %v930 = vmul.f32 %v418, 4.0
        %v931 = vmul.f32 %v419, 4.0
        %v932 = vmul.f32 %v420, 4.0
        %v933 = vmul.f32 %v421, 4.0
        %v934 = vmul.f32 %v422, 4.0
        %v935 = vmul.f32 %v423, 4.0
        %v936 = vmul.f32 %v424, 4.0
        %v937 = vmul.f32 %v425, 4.0
        %v938 = vmul.f32 %v426, 4.0
        %v939 = vmul.f32 %v427, 4.0
        %v940 = vmul.f32 %v428, 4.0
        %v941 = vmul.f32 %v429, 4.0
        %v942 = vmul.f32 %v430, 4.0
        %v943 = vmul.f32 %v431, 4.0
        %v944 = vmul.f32 %v432, 4.0
        %v945 = vmul.f32 %v433, 4.0
        %v946 = vmul.f32 %v434, 4.0
        %v947 = vmul.f32 %v435, 4.0
        %v948 = vmul.f32 %v436, 4.0
        %v949 = vmul.f32 %v437, 4.0
        %v950 = vmul.f32 %v438, 4.0
        %v951 = vmul.f32 %v439, 4.0
        %v952 = vmul.f32 %v440, 4.0
        %v953 = vmul.f32 %v441, 4.0
        %v954 = vmul.f32 %v442, 4.0
        %v955 = vmul.f32 %v443, 4.0
        %v956 = vmul.f32 %v444, 4.0
        %v957 = vmul.f32 %v445, 4.0
        %v958 = vmul.f32 %v446, 4.0
        %v959 = vmul.f32 %v447, 4.0
        %v960 = vmul.f32 %v448, 4.0
        %v961 = vmul.f32 %v449, 4.0
        %v962 = vmul.f32 %v450, 4.0
        %v963 = vmul.f32 %v451, 4.0
        %v964 = vmul.f32 %v452, 4.0
        %v965 = vmul.f32 %v453, 4.0
        %v966 = vmul.f32 %v454, 4.0
        %v967 = vmul.f32 %v455, 4.0
        %v968 = vmul.f32 %v456, 4.0
        %v969 = vmul.f32 %v457, 4.0
        %v970 = vmul.f32 %v458, 4.0
        %v971 = vmul.f32 %v459, 4.0
        %v972 = vmul.f32 %v460, 4.0
        %v973 = vmul.f32 %v461, 4.0
        %v974 = vmul.f32 %v462, 4.0
        %v975 = vmul.f32 %v463, 4.0
        %v976 = vmul.f32 %v464, 4.0
        %v977 = vmul.f32 %v465, 4.0
        %v978 = vmul.f32 %v466, 4.0
        %v979 = vmul.f32 %v467, 4.0
        %v980 = vmul.f32 %v468, 4.0
        %v981 = vmul.f32 %v469, 4.0
        %v982 = vmul.f32 %v470, 4.0
        %v983 = vmul.f32 %v471, 4.0
        %v984 = vmul.f32 %v472, 4.0
        %v985 = vmul.f32 %v473, 4.0
        %v986 = vmul.f32 %v474, 4.0
        %v987 = vmul.f32 %v475, 4.0
        %v988 = vmul.f32 %v476, 4.0
        %v989 = vmul.f32 %v477, 4.0
        %v990 = vmul.f32 %v478, 4.0
        %v991 = vmul.f32 %v479, 4.0
        %v992 = vmul.f32 %v480, 4.0
        %v993 = vmul.f32 %v481, 4.0
        %v994 = vmul.f32 %v482, 4.0
        %v995 = vmul.f32 %v483, 4.0
        %v996 = vmul.f32 %v484, 4.0
        %v997 = vmul.f32 %v485, 4.0
        %v998 = vmul.f32 %v486, 4.0
        %v999 = vmul.f32 %v487, 4.0
        %v1000 = vmul.f32 %v488, 4.0
        %v1001 = vmul.f32 %v489, 4.0
        %v1002 = vmul.f32 %v490, 4.0
        %v1003 = vmul.f32 %v491, 4.0
        %v1004 = vmul.f32 %v492, 4.0
        %v1005 = vmul.f32 %v493, 4.0
        %v1006 = vmul.f32 %v494, 4.0
        %v1007 = vmul.f32 %v495, 4.0
        %v1008 = vmul.f32 %v496, 4.0
        %v1009 = vmul.f32 %v497, 4.0
        %v1010 = vmul.f32 %v498, 4.0
        %v1011 = vmul.f32 %v499, 4.0
        %v1012 = vmul.f32 %v500, 4.0
        %v1013 = vmul.f32 %v501, 4.0
        %v1014 = vmul.f32 %v502, 4.0
        %v1015 = vmul.f32 %v503, 4.0
        %v1016 = vmul.f32 %v504, 4.0
        %v1017 = vmul.f32 %v505, 4.0
        %v1018 = vmul.f32 %v506, 4.0
        %v1019 = vmul.f32 %v507, 4.0
        %v1020 = vmul.f32 %v508, 4.0
        %v1021 = vmul.f32 %v509, 4.0
        %v1022 = vmul.f32 %v510, 4.0
        %v1023 = vmul.f32 %v511, 4.0
        %v1024 = vmul.f32 %v512, 4.0
        %v1025 = vmul.f32 %v513, 4.0
        %v1026 = vmul.f32 %v514, 4.0
        %v1027 = vmul.f32 %v515, 4.0
        %v1028 = vmul.f32 %v516, 4.0
        %v1029 = vmul.f32 %v517, 4.0
        %v1030 = vmul.f32 %v518, 4.0
        %v1031 = vmul.f32 %v519, 4.0
        %v1032 = vmul.f32 %v520, 4.0
        %v1033 = vmul.f32 %v521, 4.0
        %v1034 = vmul.f32 %v522, 4.0
        %v1035 = vmul.f32 %v523, 4.0
        %v1036 = vmul.f32 %v524, 4.0
        %v1037 = vmul.f32 %v525, 4.0
        %v1038 = vmul.f32 %v526, 4.0
        %v1039 = vmul.f32 %v527, 4.0
        %v1040 = vmul.f32 %v528, 4.0
        %v1041 = vmul.f32 %v529, 4.0
        %v1042 = vmul.f32 %v530, 4.0
        %v1043 = vmul.f32 %v531, 4.0
        %v1044 = vmul.f32 %v532, 4.0
        %v1045 = vmul.f32 %v533, 4.0
        %v1046 = vmul.f32 %v534, 4.0
        %v1047 = vmul.f32 %v535, 4.0
        %v1048 = vmul.f32 %v536, 4.0
        %v1049 = vmul.f32 %v537, 4.0
        %v1050 = vmul.f32 %v538, 4.0
        %v1051 = vmul.f32 %v539, 4.0
        %v1052 = vmul.f32 %v540, 4.0
        %v1053 = vmul.f32 %v541, 4.0
        %v1054 = vmul.f32 %v542, 4.0
        %v1055 = vmul.f32 %v543, 4.0
        %v1056 = vmul.f32 %v544, 4.0
        %v1057 = vmul.f32 %v545, 4.0
        %v1058 = vmul.f32 %v546, 4.0
        %v1059 = vmul.f32 %v547, 4.0
        %v1060 = vmul.f32 %v548, 4.0
        %v1061 = vmul.f32 %v549, 4.0
        %v1062 = vmul.f32 %v550, 4.0
        %v1063 = vmul.f32 %v551, 4.0
        %v1064 = vmul.f32 %v552, 4.0
        %v1065 = vmul.f32 %v553, 4.0
        %v1066 = vmul.f32 %v554, 4.0
        %v1067 = vmul.f32 %v555, 4.0
        %v1068 = vmul.f32 %v556, 4.0
        %v1069 = vmul.f32 %v557, 4.0
        %v1070 = vmul.f32 %v558, 4.0
        %v1071 = vmul.f32 %v559, 4.0
        %v1072 = vmul.f32 %v560, 4.0
        %v1073 = vmul.f32 %v561, 4.0
        %v1074 = vmul.f32 %v562, 4.0
        %v1075 = vmul.f32 %v563, 4.0
        %v1076 = vmul.f32 %v564, 4.0
        %v1077 = vmul.f32 %v565, 4.0
        %v1078 = vmul.f32 %v566, 4.0
        %v1079 = vmul.f32 %v567, 4.0
        %v1080 = vmul.f32 %v568, 4.0
        %v1081 = vmul.f32 %v569, 4.0
        %v1082 = vmul.f32 %v570, 4.0
        %v1083 = vmul.f32 %v571, 4.0
        %v1084 = vmul.f32 %v572, 4.0
        %v1085 = vmul.f32 %v573, 4.0
        %v1086 = vmul.f32 %v574, 4.0
        %v1087 = vmul.f32 %v575, 4.0
        %v1088 = vmul.f32 %v576, 4.0
        %v1089 = vmul.f32 %v577, 4.0
        %v1090 = vmul.f32 %v578, 4.0
        %v1091 = vmul.f32 %v579, 4.0
        %v1092 = vmul.f32 %v580, 4.0
        %v1093 = vmul.f32 %v581, 4.0
        %v1094 = vmul.f32 %v582, 4.0
        %v1095 = vmul.f32 %v583, 4.0
        %v1096 = vmul.f32 %v584, 4.0
        %v1097 = vmul.f32 %v585, 4.0
        %v1098 = vmul.f32 %v586, 4.0
        %v1099 = vmul.f32 %v587, 4.0
        %v1100 = vmul.f32 %v588, 4.0
        %v1101 = vmul.f32 %v589, 4.0
        %v1102 = vmul.f32 %v590, 4.0
        %v1103 = vmul.f32 %v591, 4.0
        %v1104 = vmul.f32 %v592, 4.0
        %v1105 = vmul.f32 %v593, 4.0
        %v1106 = vmul.f32 %v594, 4.0
        %v1107 = vmul.f32 %v595, 4.0
        %v1108 = vmul.f32 %v596, 4.0
        %v1109 = vmul.f32 %v597, 4.0
        %v1110 = vmul.f32 %v598, 4.0
        %v1111 = vmul.f32 %v599, 4.0
        %v1112 = vmul.f32 %v600, 4.0
        %v1113 = vmul.f32 %v601, 4.0
        %v1114 = vmul.f32 %v602, 4.0
        %v1115 = vmul.f32 %v603, 4.0
        %v1116 = vmul.f32 %v604, 4.0
        %v1117 = vmul.f32 %v605, 4.0
        %v1118 = vmul.f32 %v606, 4.0
        %v1119 = vmul.f32 %v607, 4.0
        %v1120 = vmul.f32 %v608, 4.0
        %v1121 = vmul.f32 %v609, 4.0
        %v1122 = vmul.f32 %v610, 4.0
        %v1123 = vmul.f32 %v611, 4.0
        %v1124 = vmul.f32 %v612, 4.0
        %v1125 = vmul.f32 %v613, 4.0
        %v1126 = vmul.f32 %v614, 4.0
        %v1127 = vmul.f32 %v615, 4.0
        %v1128 = vmul.f32 %v616, 4.0
        %v1129 = vmul.f32 %v617, 4.0
        %v1130 = vmul.f32 %v618, 4.0
        %v1131 = vmul.f32 %v619, 4.0
        %v1132 = vmul.f32 %v620, 4.0
        %v1133 = vmul.f32 %v621, 4.0
        %v1134 = vmul.f32 %v622, 4.0
        %v1135 = vmul.f32 %v623, 4.0
        %v1136 = vmul.f32 %v624, 4.0
        %v1137 = vmul.f32 %v625, 4.0
        %v1138 = vmul.f32 %v626, 4.0
        %v1139 = vmul.f32 %v627, 4.0
        %v1140 = vmul.f32 %v628, 4.0
        %v1141 = vmul.f32 %v629, 4.0
        %v1142 = vmul.f32 %v630, 4.0
        %v1143 = vmul.f32 %v631, 4.0
        %v1144 = vmul.f32 %v632, 4.0
        %v1145 = vmul.f32 %v633, 4.0
        %v1146 = vmul.f32 %v634, 4.0
        %v1147 = vmul.f32 %v635, 4.0
        %v1148 = vmul.f32 %v636, 4.0
        %v1149 = vmul.f32 %v637, 4.0
        %v1150 = vmul.f32 %v638, 4.0
        %v1151 = vmul.f32 %v639, 4.0
        %v1152 = vmul.f32 %v640, 4.0
        %v1153 = vmul.f32 %v641, 4.0
        %v1154 = vmul.f32 %v642, 4.0
        %v1155 = vmul.f32 %v643, 4.0
        %v1156 = vmul.f32 %v644, 4.0
        %v1157 = vmul.f32 %v645, 4.0
        %v1158 = vmul.f32 %v646, 4.0
        %v1159 = vmul.f32 %v647, 4.0
        %v1160 = vmul.f32 %v648, 4.0
        %v1161 = vmul.f32 %v649, 4.0
        %v1162 = vmul.f32 %v650, 4.0
        %v1163 = vmul.f32 %v651, 4.0
        %v1164 = vadd.f32 %v652, 1.0
        %v1165 = vadd.f32 %v653, 1.0
        %v1166 = vadd.f32 %v654, 1.0
        %v1167 = vadd.f32 %v655, 1.0
        %v1168 = vadd.f32 %v656, 1.0
        %v1169 = vadd.f32 %v657, 1.0
        %v1170 = vadd.f32 %v658, 1.0
        %v1171 = vadd.f32 %v659, 1.0
        %v1172 = vadd.f32 %v660, 1.0
        %v1173 = vadd.f32 %v661, 1.0
        %v1174 = vadd.f32 %v662, 1.0
        %v1175 = vadd.f32 %v663, 1.0
        %v1176 = vadd.f32 %v664, 1.0
        %v1177 = vadd.f32 %v665, 1.0
        %v1178 = vadd.f32 %v666, 1.0
        %v1179 = vadd.f32 %v667, 1.0
        %v1180 = vadd.f32 %v668, 1.0
        %v1181 = vadd.f32 %v669, 1.0
        %v1182 = vadd.f32 %v670, 1.0
        %v1183 = vadd.f32 %v671, 1.0
        %v1184 = vadd.f32 %v672, 1.0
        %v1185 = vadd.f32 %v673, 1.0
        %v1186 = vadd.f32 %v674, 1.0
        %v1187 = vadd.f32 %v675, 1.0
        %v1188 = vadd.f32 %v676, 1.0
        %v1189 = vadd.f32 %v677, 1.0
        %v1190 = vadd.f32 %v678, 1.0
        %v1191 = vadd.f32 %v679, 1.0
        %v1192 = vadd.f32 %v680, 1.0
        %v1193 = vadd.f32 %v681, 1.0
        %v1194 = vadd.f32 %v682, 1.0
        %v1195 = vadd.f32 %v683, 1.0
        %v1196 = vadd.f32 %v684, 1.0
        %v1197 = vadd.f32 %v685, 1.0
        %v1198 = vadd.f32 %v686, 1.0
        %v1199 = vadd.f32 %v687, 1.0
        %v1200 = vadd.f32 %v688, 1.0
        %v1201 = vadd.f32 %v689, 1.0
        %v1202 = vadd.f32 %v690, 1.0
        %v1203 = vadd.f32 %v691, 1.0
        %v1204 = vadd.f32 %v692, 1.0
        %v1205 = vadd.f32 %v693, 1.0
        %v1206 = vadd.f32 %v694, 1.0
        %v1207 = vadd.f32 %v695, 1.0
        %v1208 = vadd.f32 %v696, 1.0
        %v1209 = vadd.f32 %v697, 1.0
        %v1210 = vadd.f32 %v698, 1.0
        %v1211 = vadd.f32 %v699, 1.0
        %v1212 = vadd.f32 %v700, 1.0
        %v1213 = vadd.f32 %v701, 1.0
        %v1214 = vadd.f32 %v702, 1.0
        %v1215 = vadd.f32 %v703, 1.0
        %v1216 = vadd.f32 %v704, 1.0
        %v1217 = vadd.f32 %v705, 1.0
        %v1218 = vadd.f32 %v706, 1.0
        %v1219 = vadd.f32 %v707, 1.0
        %v1220 = vadd.f32 %v708, 1.0
        %v1221 = vadd.f32 %v709, 1.0
        %v1222 = vadd.f32 %v710, 1.0
        %v1223 = vadd.f32 %v711, 1.0
        %v1224 = vadd.f32 %v712, 1.0
        %v1225 = vadd.f32 %v713, 1.0
        %v1226 = vadd.f32 %v714, 1.0
        %v1227 = vadd.f32 %v715, 1.0
        %v1228 = vadd.f32 %v716, 1.0
        %v1229 = vadd.f32 %v717, 1.0
        %v1230 = vadd.f32 %v718, 1.0
        %v1231 = vadd.f32 %v719, 1.0
        %v1232 = vadd.f32 %v720, 1.0
        %v1233 = vadd.f32 %v721, 1.0
        %v1234 = vadd.f32 %v722, 1.0
        %v1235 = vadd.f32 %v723, 1.0
        %v1236 = vadd.f32 %v724, 1.0
        %v1237 = vadd.f32 %v725, 1.0
        %v1238 = vadd.f32 %v726, 1.0
        %v1239 = vadd.f32 %v727, 1.0
        %v1240 = vadd.f32 %v728, 1.0
        %v1241 = vadd.f32 %v729, 1.0
        %v1242 = vadd.f32 %v730, 1.0
        %v1243 = vadd.f32 %v731, 1.0
        %v1244 = vadd.f32 %v732, 1.0
        %v1245 = vadd.f32 %v733, 1.0
        %v1246 = vadd.f32 %v734, 1.0
        %v1247 = vadd.f32 %v735, 1.0
        %v1248 = vadd.f32 %v736, 1.0
        %v1249 = vadd.f32 %v737, 1.0
        %v1250 = vadd.f32 %v738, 1.0
        %v1251 = vadd.f32 %v739, 1.0
        %v1252 = vadd.f32 %v740, 1.0
        %v1253 = vadd.f32 %v741, 1.0
        %v1254 = vadd.f32 %v742, 1.0
        %v1255 = vadd.f32 %v743, 1.0
        %v1256 = vadd.f32 %v744, 1.0
        %v1257 = vadd.f32 %v745, 1.0
        %v1258 = vadd.f32 %v746, 1.0
        %v1259 = vadd.f32 %v747, 1.0
        %v1260 = vadd.f32 %v748, 1.0
        %v1261 = vadd.f32 %v749, 1.0
        %v1262 = vadd.f32 %v750, 1.0
        %v1263 = vadd.f32 %v751, 1.0
        %v1264 = vadd.f32 %v752, 1.0
        %v1265 = vadd.f32 %v753, 1.0
        %v1266 = vadd.f32 %v754, 1.0
        %v1267 = vadd.f32 %v755, 1.0
        %v1268 = vadd.f32 %v756, 1.0
        %v1269 = vadd.f32 %v757, 1.0
        %v1270 = vadd.f32 %v758, 1.0
        %v1271 = vadd.f32 %v759, 1.0
        %v1272 = vadd.f32 %v760, 1.0
        %v1273 = vadd.f32 %v761, 1.0
        %v1274 = vadd.f32 %v762, 1.0
        %v1275 = vadd.f32 %v763, 1.0
        %v1276 = vadd.f32 %v764, 1.0
        %v1277 = vadd.f32 %v765, 1.0
        %v1278 = vadd.f32 %v766, 1.0
        %v1279 = vadd.f32 %v767, 1.0
        %v1280 = vadd.f32 %v768, 1.0
        %v1281 = vadd.f32 %v769, 1.0
        %v1282 = vadd.f32 %v770, 1.0
        %v1283 = vadd.f32 %v771, 1.0
        %v1284 = vadd.f32 %v772, 1.0
        %v1285 = vadd.f32 %v773, 1.0
        %v1286 = vadd.f32 %v774, 1.0
        %v1287 = vadd.f32 %v775, 1.0
        %v1288 = vadd.f32 %v776, 1.0
        %v1289 = vadd.f32 %v777, 1.0
        %v1290 = vadd.f32 %v778, 1.0
        %v1291 = vadd.f32 %v779, 1.0
        %v1292 = vadd.f32 %v780, 1.0
        %v1293 = vadd.f32 %v781, 1.0
        %v1294 = vadd.f32 %v782, 1.0
        %v1295 = vadd.f32 %v783, 1.0
        %v1296 = vadd.f32 %v784, 1.0
        %v1297 = vadd.f32 %v785, 1.0
        %v1298 = vadd.f32 %v786, 1.0
        %v1299 = vadd.f32 %v787, 1.0
        %v1300 = vadd.f32 %v788, 1.0
        %v1301 = vadd.f32 %v789, 1.0
        %v1302 = vadd.f32 %v790, 1.0
        %v1303 = vadd.f32 %v791, 1.0
        %v1304 = vadd.f32 %v792, 1.0
        %v1305 = vadd.f32 %v793, 1.0
        %v1306 = vadd.f32 %v794, 1.0
        %v1307 = vadd.f32 %v795, 1.0
        %v1308 = vadd.f32 %v796, 1.0
        %v1309 = vadd.f32 %v797, 1.0
        %v1310 = vadd.f32 %v798, 1.0
        %v1311 = vadd.f32 %v799, 1.0
        %v1312 = vadd.f32 %v800, 1.0
        %v1313 = vadd.f32 %v801, 1.0
        %v1314 = vadd.f32 %v802, 1.0
        %v1315 = vadd.f32 %v803, 1.0
        %v1316 = vadd.f32 %v804, 1.0
        %v1317 = vadd.f32 %v805, 1.0
        %v1318 = vadd.f32 %v806, 1.0
        %v1319 = vadd.f32 %v807, 1.0
        %v1320 = vadd.f32 %v808, 1.0
        %v1321 = vadd.f32 %v809, 1.0
        %v1322 = vadd.f32 %v810, 1.0
        %v1323 = vadd.f32 %v811, 1.0
        %v1324 = vadd.f32 %v812, 1.0
        %v1325 = vadd.f32 %v813, 1.0
        %v1326 = vadd.f32 %v814, 1.0
        %v1327 = vadd.f32 %v815, 1.0
        %v1328 = vadd.f32 %v816, 1.0
        %v1329 = vadd.f32 %v817, 1.0
        %v1330 = vadd.f32 %v818, 1.0
        %v1331 = vadd.f32 %v819, 1.0
        %v1332 = vadd.f32 %v820, 1.0
        %v1333 = vadd.f32 %v821, 1.0
        %v1334 = vadd.f32 %v822, 1.0
        %v1335 = vadd.f32 %v823, 1.0
        %v1336 = vadd.f32 %v824, 1.0
        %v1337 = vadd.f32 %v825, 1.0
        %v1338 = vadd.f32 %v826, 1.0
        %v1339 = vadd.f32 %v827, 1.0
        %v1340 = vadd.f32 %v828, 1.0
        %v1341 = vadd.f32 %v829, 1.0
        %v1342 = vadd.f32 %v830, 1.0
        %v1343 = vadd.f32 %v831, 1.0
        %v1344 = vadd.f32 %v832, 1.0
        %v1345 = vadd.f32 %v833, 1.0
        %v1346 = vadd.f32 %v834, 1.0
        %v1347 = vadd.f32 %v835, 1.0
        %v1348 = vadd.f32 %v836, 1.0
        %v1349 = vadd.f32 %v837, 1.0
        %v1350 = vadd.f32 %v838, 1.0
        %v1351 = vadd.f32 %v839, 1.0
        %v1352 = vadd.f32 %v840, 1.0
        %v1353 = vadd.f32 %v841, 1.0
        %v1354 = vadd.f32 %v842, 1.0
        %v1355 = vadd.f32 %v843, 1.0
        %v1356 = vadd.f32 %v844, 1.0
        %v1357 = vadd.f32 %v845, 1.0
        %v1358 = vadd.f32 %v846, 1.0
        %v1359 = vadd.f32 %v847, 1.0
        %v1360 = vadd.f32 %v848, 1.0
        %v1361 = vadd.f32 %v849, 1.0
        %v1362 = vadd.f32 %v850, 1.0
        %v1363 = vadd.f32 %v851, 1.0
        %v1364 = vadd.f32 %v852, 1.0
        %v1365 = vadd.f32 %v853, 1.0
        %v1366 = vadd.f32 %v854, 1.0
        %v1367 = vadd.f32 %v855, 1.0
        %v1368 = vadd.f32 %v856, 1.0
        %v1369 = vadd.f32 %v857, 1.0
        %v1370 = vadd.f32 %v858, 1.0
        %v1371 = vadd.f32 %v859, 1.0
        %v1372 = vadd.f32 %v860, 1.0
        %v1373 = vadd.f32 %v861, 1.0
        %v1374 = vadd.f32 %v862, 1.0
        %v1375 = vadd.f32 %v863, 1.0
        %v1376 = vadd.f32 %v864, 1.0
        %v1377 = vadd.f32 %v865, 1.0
        %v1378 = vadd.f32 %v866, 1.0
        %v1379 = vadd.f32 %v867, 1.0
        %v1380 = vadd.f32 %v868, 1.0
        %v1381 = vadd.f32 %v869, 1.0
        %v1382 = vadd.f32 %v870, 1.0
        %v1383 = vadd.f32 %v871, 1.0
        %v1384 = vadd.f32 %v872, 1.0
        %v1385 = vadd.f32 %v873, 1.0
        %v1386 = vadd.f32 %v874, 1.0
        %v1387 = vadd.f32 %v875, 1.0
        %v1388 = vadd.f32 %v876, 1.0
        %v1389 = vadd.f32 %v877, 1.0
        %v1390 = vadd.f32 %v878, 1.0
        %v1391 = vadd.f32 %v879, 1.0
        %v1392 = vadd.f32 %v880, 1.0
        %v1393 = vadd.f32 %v881, 1.0
        %v1394 = vadd.f32 %v882, 1.0
        %v1395 = vadd.f32 %v883, 1.0
        %v1396 = vadd.f32 %v884, 1.0
        %v1397 = vadd.f32 %v885, 1.0
        %v1398 = vadd.f32 %v886, 1.0
        %v1399 = vadd.f32 %v887, 1.0
        %v1400 = vadd.f32 %v888, 1.0
        %v1401 = vadd.f32 %v889, 1.0
        %v1402 = vadd.f32 %v890, 1.0
        %v1403 = vadd.f32 %v891, 1.0
        %v1404 = vadd.f32 %v892, 1.0
        %v1405 = vadd.f32 %v893, 1.0
        %v1406 = vadd.f32 %v894, 1.0
        %v1407 = vadd.f32 %v895, 1.0
        %v1408 = vadd.f32 %v896, 1.0
        %v1409 = vadd.f32 %v897, 1.0
        %v1410 = vadd.f32 %v898, 1.0
        %v1411 = vadd.f32 %v899, 1.0
        %v1412 = vadd.f32 %v900, 1.0
        %v1413 = vadd.f32 %v901, 1.0
        %v1414 = vadd.f32 %v902, 1.0
        %v1415 = vadd.f32 %v903, 1.0
        %v1416 = vadd.f32 %v904, 1.0
        %v1417 = vadd.f32 %v905, 1.0
        %v1418 = vadd.f32 %v906, 1.0
        %v1419 = vadd.f32 %v907, 1.0
        %v1420 = vadd.f32 %v908, 1.0
        %v1421 = vadd.f32 %v909, 1.0
        %v1422 = vadd.f32 %v910, 1.0
        %v1423 = vadd.f32 %v911, 1.0
        %v1424 = vadd.f32 %v912, 1.0
        %v1425 = vadd.f32 %v913, 1.0
        %v1426 = vadd.f32 %v914, 1.0
        %v1427 = vadd.f32 %v915, 1.0
        %v1428 = vadd.f32 %v916, 1.0
        %v1429 = vadd.f32 %v917, 1.0
        %v1430 = vadd.f32 %v918, 1.0
        %v1431 = vadd.f32 %v919, 1.0
        %v1432 = vadd.f32 %v920, 1.0
        %v1433 = vadd.f32 %v921, 1.0
        %v1434 = vadd.f32 %v922, 1.0
        %v1435 = vadd.f32 %v923, 1.0
        %v1436 = vadd.f32 %v924, 1.0
        %v1437 = vadd.f32 %v925, 1.0
        %v1438 = vadd.f32 %v926, 1.0
        %v1439 = vadd.f32 %v927, 1.0
        %v1440 = vadd.f32 %v928, 1.0
        %v1441 = vadd.f32 %v929, 1.0
        %v1442 = vadd.f32 %v930, 1.0
        %v1443 = vadd.f32 %v931, 1.0
        %v1444 = vadd.f32 %v932, 1.0
        %v1445 = vadd.f32 %v933, 1.0
        %v1446 = vadd.f32 %v934, 1.0
        %v1447 = vadd.f32 %v935, 1.0
        %v1448 = vadd.f32 %v936, 1.0
        %v1449 = vadd.f32 %v937, 1.0
        %v1450 = vadd.f32 %v938, 1.0
        %v1451 = vadd.f32 %v939, 1.0
        %v1452 = vadd.f32 %v940, 1.0
        %v1453 = vadd.f32 %v941, 1.0
        %v1454 = vadd.f32 %v942, 1.0
        %v1455 = vadd.f32 %v943, 1.0
        %v1456 = vadd.f32 %v944, 1.0
        %v1457 = vadd.f32 %v945, 1.0
        %v1458 = vadd.f32 %v946, 1.0
        %v1459 = vadd.f32 %v947, 1.0
        %v1460 = vadd.f32 %v948, 1.0
        %v1461 = vadd.f32 %v949, 1.0
        %v1462 = vadd.f32 %v950, 1.0
        %v1463 = vadd.f32 %v951, 1.0
        %v1464 = vadd.f32 %v952, 1.0
        %v1465 = vadd.f32 %v953, 1.0
        %v1466 = vadd.f32 %v954, 1.0
        %v1467 = vadd.f32 %v955, 1.0
        %v1468 = vadd.f32 %v956, 1.0
        %v1469 = vadd.f32 %v957, 1.0
        %v1470 = vadd.f32 %v958, 1.0
        %v1471 = vadd.f32 %v959, 1.0
        %v1472 = vadd.f32 %v960, 1.0
        %v1473 = vadd.f32 %v961, 1.0
        %v1474 = vadd.f32 %v962, 1.0
        %v1475 = vadd.f32 %v963, 1.0
        %v1476 = vadd.f32 %v964, 1.0
        %v1477 = vadd.f32 %v965, 1.0
        %v1478 = vadd.f32 %v966, 1.0
        %v1479 = vadd.f32 %v967, 1.0
        %v1480 = vadd.f32 %v968, 1.0
        %v1481 = vadd.f32 %v969, 1.0
        %v1482 = vadd.f32 %v970, 1.0
        %v1483 = vadd.f32 %v971, 1.0
        %v1484 = vadd.f32 %v972, 1.0
        %v1485 = vadd.f32 %v973, 1.0
        %v1486 = vadd.f32 %v974, 1.0
        %v1487 = vadd.f32 %v975, 1.0
        %v1488 = vadd.f32 %v976, 1.0
        %v1489 = vadd.f32 %v977, 1.0
        %v1490 = vadd.f32 %v978, 1.0
        %v1491 = vadd.f32 %v979, 1.0
        %v1492 = vadd.f32 %v980, 1.0
        %v1493 = vadd.f32 %v981, 1.0
        %v1494 = vadd.f32 %v982, 1.0
        %v1495 = vadd.f32 %v983, 1.0
        %v1496 = vadd.f32 %v984, 1.0
        %v1497 = vadd.f32 %v985, 1.0
        %v1498 = vadd.f32 %v986, 1.0
        %v1499 = vadd.f32 %v987, 1.0
        %v1500 = vadd.f32 %v988, 1.0
        %v1501 = vadd.f32 %v989, 1.0
        %v1502 = vadd.f32 %v990, 1.0
        %v1503 = vadd.f32 %v991, 1.0
        %v1504 = vadd.f32 %v992, 1.0
        %v1505 = vadd.f32 %v993, 1.0
        %v1506 = vadd.f32 %v994, 1.0
        %v1507 = vadd.f32 %v995, 1.0
        %v1508 = vadd.f32 %v996, 1.0
        %v1509 = vadd.f32 %v997, 1.0
        %v1510 = vadd.f32 %v998, 1.0
        %v1511 = vadd.f32 %v999, 1.0
        %v1512 = vadd.f32 %v1000, 1.0
        %v1513 = vadd.f32 %v1001, 1.0
        %v1514 = vadd.f32 %v1002, 1.0
        %v1515 = vadd.f32 %v1003, 1.0
        %v1516 = vadd.f32 %v1004, 1.0
        %v1517 = vadd.f32 %v1005, 1.0
        %v1518 = vadd.f32 %v1006, 1.0
        %v1519 = vadd.f32 %v1007, 1.0
        %v1520 = vadd.f32 %v1008, 1.0
        %v1521 = vadd.f32 %v1009, 1.0
        %v1522 = vadd.f32 %v1010, 1.0
        %v1523 = vadd.f32 %v1011, 1.0
        %v1524 = vadd.f32 %v1012, 1.0
        %v1525 = vadd.f32 %v1013, 1.0
        %v1526 = vadd.f32 %v1014, 1.0
        %v1527 = vadd.f32 %v1015, 1.0
        %v1528 = vadd.f32 %v1016, 1.0
        %v1529 = vadd.f32 %v1017, 1.0
        %v1530 = vadd.f32 %v1018, 1.0
        %v1531 = vadd.f32 %v1019, 1.0
        %v1532 = vadd.f32 %v1020, 1.0
        %v1533 = vadd.f32 %v1021, 1.0
        %v1534 = vadd.f32 %v1022, 1.0
        %v1535 = vadd.f32 %v1023, 1.0
        %v1536 = vadd.f32 %v1024, 1.0
        %v1537 = vadd.f32 %v1025, 1.0
        %v1538 = vadd.f32 %v1026, 1.0
        %v1539 = vadd.f32 %v1027, 1.0
        %v1540 = vadd.f32 %v1028, 1.0
        %v1541 = vadd.f32 %v1029, 1.0
        %v1542 = vadd.f32 %v1030, 1.0
        %v1543 = vadd.f32 %v1031, 1.0
        %v1544 = vadd.f32 %v1032, 1.0
        %v1545 = vadd.f32 %v1033, 1.0
        %v1546 = vadd.f32 %v1034, 1.0
        %v1547 = vadd.f32 %v1035, 1.0
        %v1548 = vadd.f32 %v1036, 1.0
        %v1549 = vadd.f32 %v1037, 1.0
        %v1550 = vadd.f32 %v1038, 1.0
        %v1551 = vadd.f32 %v1039, 1.0
        %v1552 = vadd.f32 %v1040, 1.0
        %v1553 = vadd.f32 %v1041, 1.0
        %v1554 = vadd.f32 %v1042, 1.0
        %v1555 = vadd.f32 %v1043, 1.0
        %v1556 = vadd.f32 %v1044, 1.0
        %v1557 = vadd.f32 %v1045, 1.0
        %v1558 = vadd.f32 %v1046, 1.0
        %v1559 = vadd.f32 %v1047, 1.0
        %v1560 = vadd.f32 %v1048, 1.0
        %v1561 = vadd.f32 %v1049, 1.0
        %v1562 = vadd.f32 %v1050, 1.0
        %v1563 = vadd.f32 %v1051, 1.0
        %v1564 = vadd.f32 %v1052, 1.0
        %v1565 = vadd.f32 %v1053, 1.0
        %v1566 = vadd.f32 %v1054, 1.0
        %v1567 = vadd.f32 %v1055, 1.0
        %v1568 = vadd.f32 %v1056, 1.0
        %v1569 = vadd.f32 %v1057, 1.0
        %v1570 = vadd.f32 %v1058, 1.0
        %v1571 = vadd.f32 %v1059, 1.0
        %v1572 = vadd.f32 %v1060, 1.0
        %v1573 = vadd.f32 %v1061, 1.0
        %v1574 = vadd.f32 %v1062, 1.0
        %v1575 = vadd.f32 %v1063, 1.0
        %v1576 = vadd.f32 %v1064, 1.0
        %v1577 = vadd.f32 %v1065, 1.0
        %v1578 = vadd.f32 %v1066, 1.0
        %v1579 = vadd.f32 %v1067, 1.0
        %v1580 = vadd.f32 %v1068, 1.0
        %v1581 = vadd.f32 %v1069, 1.0
        %v1582 = vadd.f32 %v1070, 1.0
        %v1583 = vadd.f32 %v1071, 1.0
        %v1584 = vadd.f32 %v1072, 1.0
        %v1585 = vadd.f32 %v1073, 1.0
        %v1586 = vadd.f32 %v1074, 1.0
        %v1587 = vadd.f32 %v1075, 1.0
        %v1588 = vadd.f32 %v1076, 1.0
        %v1589 = vadd.f32 %v1077, 1.0
        %v1590 = vadd.f32 %v1078, 1.0
        %v1591 = vadd.f32 %v1079, 1.0
        %v1592 = vadd.f32 %v1080, 1.0
        %v1593 = vadd.f32 %v1081, 1.0
        %v1594 = vadd.f32 %v1082, 1.0
        %v1595 = vadd.f32 %v1083, 1.0
        %v1596 = vadd.f32 %v1084, 1.0
        %v1597 = vadd.f32 %v1085, 1.0
        %v1598 = vadd.f32 %v1086, 1.0
        %v1599 = vadd.f32 %v1087, 1.0
        %v1600 = vadd.f32 %v1088, 1.0
        %v1601 = vadd.f32 %v1089, 1.0
        %v1602 = vadd.f32 %v1090, 1.0
        %v1603 = vadd.f32 %v1091, 1.0
        %v1604 = vadd.f32 %v1092, 1.0
        %v1605 = vadd.f32 %v1093, 1.0
        %v1606 = vadd.f32 %v1094, 1.0
        %v1607 = vadd.f32 %v1095, 1.0
        %v1608 = vadd.f32 %v1096, 1.0
        %v1609 = vadd.f32 %v1097, 1.0
        %v1610 = vadd.f32 %v1098, 1.0
        %v1611 = vadd.f32 %v1099, 1.0
        %v1612 = vadd.f32 %v1100, 1.0
        %v1613 = vadd.f32 %v1101, 1.0
        %v1614 = vadd.f32 %v1102, 1.0
        %v1615 = vadd.f32 %v1103, 1.0
        %v1616 = vadd.f32 %v1104, 1.0
        %v1617 = vadd.f32 %v1105, 1.0
        %v1618 = vadd.f32 %v1106, 1.0
        %v1619 = vadd.f32 %v1107, 1.0
        %v1620 = vadd.f32 %v1108, 1.0
        %v1621 = vadd.f32 %v1109, 1.0
        %v1622 = vadd.f32 %v1110, 1.0
        %v1623 = vadd.f32 %v1111, 1.0
        %v1624 = vadd.f32 %v1112, 1.0
        %v1625 = vadd.f32 %v1113, 1.0
        %v1626 = vadd.f32 %v1114, 1.0
        %v1627 = vadd.f32 %v1115, 1.0
        %v1628 = vadd.f32 %v1116, 1.0
        %v1629 = vadd.f32 %v1117, 1.0
        %v1630 = vadd.f32 %v1118, 1.0
        %v1631 = vadd.f32 %v1119, 1.0
        %v1632 = vadd.f32 %v1120, 1.0
        %v1633 = vadd.f32 %v1121, 1.0
        %v1634 = vadd.f32 %v1122, 1.0
        %v1635 = vadd.f32 %v1123, 1.0
        %v1636 = vadd.f32 %v1124, 1.0
        %v1637 = vadd.f32 %v1125, 1.0
        %v1638 = vadd.f32 %v1126, 1.0
        %v1639 = vadd.f32 %v1127, 1.0
        %v1640 = vadd.f32 %v1128, 1.0
        %v1641 = vadd.f32 %v1129, 1.0
        %v1642 = vadd.f32 %v1130, 1.0
        %v1643 = vadd.f32 %v1131, 1.0
        %v1644 = vadd.f32 %v1132, 1.0
        %v1645 = vadd.f32 %v1133, 1.0
        %v1646 = vadd.f32 %v1134, 1.0
        %v1647 = vadd.f32 %v1135, 1.0
        %v1648 = vadd.f32 %v1136, 1.0
        %v1649 = vadd.f32 %v1137, 1.0
        %v1650 = vadd.f32 %v1138, 1.0
        %v1651 = vadd.f32 %v1139, 1.0
        %v1652 = vadd.f32 %v1140, 1.0
        %v1653 = vadd.f32 %v1141, 1.0
        %v1654 = vadd.f32 %v1142, 1.0
        %v1655 = vadd.f32 %v1143, 1.0
        %v1656 = vadd.f32 %v1144, 1.0
        %v1657 = vadd.f32 %v1145, 1.0
        %v1658 = vadd.f32 %v1146, 1.0
        %v1659 = vadd.f32 %v1147, 1.0
        %v1660 = vadd.f32 %v1148, 1.0
        %v1661 = vadd.f32 %v1149, 1.0
        %v1662 = vadd.f32 %v1150, 1.0
        %v1663 = vadd.f32 %v1151, 1.0
        %v1664 = vadd.f32 %v1152, 1.0
        %v1665 = vadd.f32 %v1153, 1.0
        %v1666 = vadd.f32 %v1154, 1.0
        %v1667 = vadd.f32 %v1155, 1.0
        %v1668 = vadd.f32 %v1156, 1.0
        %v1669 = vadd.f32 %v1157, 1.0
        %v1670 = vadd.f32 %v1158, 1.0
        %v1671 = vadd.f32 %v1159, 1.0
        %v1672 = vadd.f32 %v1160, 1.0
        %v1673 = vadd.f32 %v1161, 1.0
        %v1674 = vadd.f32 %v1162, 1.0
        %v1675 = vadd.f32 %v1163, 1.0
        %1676 = vst [vmem:[%s137] sm:$0xff] %v1164
        %1677 = vst [vmem:[%s137 + $0x8] sm:$0xff] %v1165
        %1678 = vst [vmem:[%s137 + $0x10] sm:$0xff] %v1166
        %1679 = vst [vmem:[%s137 + $0x18] sm:$0xff] %v1167
        %1680 = vst [vmem:[%s137 + $0x20] sm:$0xff] %v1168
        %1681 = vst [vmem:[%s137 + $0x28] sm:$0xff] %v1169
        %1682 = vst [vmem:[%s137 + $0x30] sm:$0xff] %v1170
        %1683 = vst [vmem:[%s137 + $0x38] sm:$0xff] %v1171
        %1684 = vst [vmem:[%s137 + $0x40] sm:$0xff] %v1172
        %1685 = vst [vmem:[%s137 + $0x48] sm:$0xff] %v1173
        %1686 = vst [vmem:[%s137 + $0x50] sm:$0xff] %v1174
        %1687 = vst [vmem:[%s137 + $0x58] sm:$0xff] %v1175
        %1688 = vst [vmem:[%s137 + $0x60] sm:$0xff] %v1176
        %1689 = vst [vmem:[%s137 + $0x68] sm:$0xff] %v1177
        %1690 = vst [vmem:[%s137 + $0x70] sm:$0xff] %v1178
        %1691 = vst [vmem:[%s137 + $0x78] sm:$0xff] %v1179
        %1692 = vst [vmem:[%s137 + $0x80] sm:$0xff] %v1180
        %1693 = vst [vmem:[%s137 + $0x88] sm:$0xff] %v1181
        %1694 = vst [vmem:[%s137 + $0x90] sm:$0xff] %v1182
        %1695 = vst [vmem:[%s137 + $0x98] sm:$0xff] %v1183
        %1696 = vst [vmem:[%s137 + $0xa0] sm:$0xff] %v1184
        %1697 = vst [vmem:[%s137 + $0xa8] sm:$0xff] %v1185
        %1698 = vst [vmem:[%s137 + $0xb0] sm:$0xff] %v1186
        %1699 = vst [vmem:[%s137 + $0xb8] sm:$0xff] %v1187
        %1700 = vst [vmem:[%s137 + $0xc0] sm:$0xff] %v1188
        %1701 = vst [vmem:[%s137 + $0xc8] sm:$0xff] %v1189
        %1702 = vst [vmem:[%s137 + $0xd0] sm:$0xff] %v1190
        %1703 = vst [vmem:[%s137 + $0xd8] sm:$0xff] %v1191
        %1704 = vst [vmem:[%s137 + $0xe0] sm:$0xff] %v1192
        %1705 = vst [vmem:[%s137 + $0xe8] sm:$0xff] %v1193
        %1706 = vst [vmem:[%s137 + $0xf0] sm:$0xff] %v1194
        %1707 = vst [vmem:[%s137 + $0xf8] sm:$0xff] %v1195
        %1708 = vst [vmem:[%s137 + $0x100] sm:$0xff] %v1196
        %1709 = vst [vmem:[%s137 + $0x108] sm:$0xff] %v1197
        %1710 = vst [vmem:[%s137 + $0x110] sm:$0xff] %v1198
        %1711 = vst [vmem:[%s137 + $0x118] sm:$0xff] %v1199
        %1712 = vst [vmem:[%s137 + $0x120] sm:$0xff] %v1200
        %1713 = vst [vmem:[%s137 + $0x128] sm:$0xff] %v1201
        %1714 = vst [vmem:[%s137 + $0x130] sm:$0xff] %v1202
        %1715 = vst [vmem:[%s137 + $0x138] sm:$0xff] %v1203
        %1716 = vst [vmem:[%s137 + $0x140] sm:$0xff] %v1204
        %1717 = vst [vmem:[%s137 + $0x148] sm:$0xff] %v1205
        %1718 = vst [vmem:[%s137 + $0x150] sm:$0xff] %v1206
        %1719 = vst [vmem:[%s137 + $0x158] sm:$0xff] %v1207
        %1720 = vst [vmem:[%s137 + $0x160] sm:$0xff] %v1208
        %1721 = vst [vmem:[%s137 + $0x168] sm:$0xff] %v1209
        %1722 = vst [vmem:[%s137 + $0x170] sm:$0xff] %v1210
        %1723 = vst [vmem:[%s137 + $0x178] sm:$0xff] %v1211
        %1724 = vst [vmem:[%s137 + $0x180] sm:$0xff] %v1212
        %1725 = vst [vmem:[%s137 + $0x188] sm:$0xff] %v1213
        %1726 = vst [vmem:[%s137 + $0x190] sm:$0xff] %v1214
        %1727 = vst [vmem:[%s137 + $0x198] sm:$0xff] %v1215
        %1728 = vst [vmem:[%s137 + $0x1a0] sm:$0xff] %v1216
        %1729 = vst [vmem:[%s137 + $0x1a8] sm:$0xff] %v1217
        %1730 = vst [vmem:[%s137 + $0x1b0] sm:$0xff] %v1218
        %1731 = vst [vmem:[%s137 + $0x1b8] sm:$0xff] %v1219
        %1732 = vst [vmem:[%s137 + $0x1c0] sm:$0xff] %v1220
        %1733 = vst [vmem:[%s137 + $0x1c8] sm:$0xff] %v1221
        %1734 = vst [vmem:[%s137 + $0x1d0] sm:$0xff] %v1222
        %1735 = vst [vmem:[%s137 + $0x1d8] sm:$0xff] %v1223
        %1736 = vst [vmem:[%s137 + $0x1e0] sm:$0xff] %v1224
        %1737 = vst [vmem:[%s137 + $0x1e8] sm:$0xff] %v1225
        %1738 = vst [vmem:[%s137 + $0x1f0] sm:$0xff] %v1226
        %1739 = vst [vmem:[%s137 + $0x1f8] sm:$0xff] %v1227
        %1740 = vst [vmem:[%s137 + $0x200] sm:$0xff] %v1228
        %1741 = vst [vmem:[%s137 + $0x208] sm:$0xff] %v1229
        %1742 = vst [vmem:[%s137 + $0x210] sm:$0xff] %v1230
        %1743 = vst [vmem:[%s137 + $0x218] sm:$0xff] %v1231
        %1744 = vst [vmem:[%s137 + $0x220] sm:$0xff] %v1232
        %1745 = vst [vmem:[%s137 + $0x228] sm:$0xff] %v1233
        %1746 = vst [vmem:[%s137 + $0x230] sm:$0xff] %v1234
        %1747 = vst [vmem:[%s137 + $0x238] sm:$0xff] %v1235
        %1748 = vst [vmem:[%s137 + $0x240] sm:$0xff] %v1236
        %1749 = vst [vmem:[%s137 + $0x248] sm:$0xff] %v1237
        %1750 = vst [vmem:[%s137 + $0x250] sm:$0xff] %v1238
        %1751 = vst [vmem:[%s137 + $0x258] sm:$0xff] %v1239
        %1752 = vst [vmem:[%s137 + $0x260] sm:$0xff] %v1240
        %1753 = vst [vmem:[%s137 + $0x268] sm:$0xff] %v1241
        %1754 = vst [vmem:[%s137 + $0x270] sm:$0xff] %v1242
        %1755 = vst [vmem:[%s137 + $0x278] sm:$0xff] %v1243
        %1756 = vst [vmem:[%s137 + $0x280] sm:$0xff] %v1244
        %1757 = vst [vmem:[%s137 + $0x288] sm:$0xff] %v1245
        %1758 = vst [vmem:[%s137 + $0x290] sm:$0xff] %v1246
        %1759 = vst [vmem:[%s137 + $0x298] sm:$0xff] %v1247
        %1760 = vst [vmem:[%s137 + $0x2a0] sm:$0xff] %v1248
        %1761 = vst [vmem:[%s137 + $0x2a8] sm:$0xff] %v1249
        %1762 = vst [vmem:[%s137 + $0x2b0] sm:$0xff] %v1250
        %1763 = vst [vmem:[%s137 + $0x2b8] sm:$0xff] %v1251
        %1764 = vst [vmem:[%s137 + $0x2c0] sm:$0xff] %v1252
        %1765 = vst [vmem:[%s137 + $0x2c8] sm:$0xff] %v1253
        %1766 = vst [vmem:[%s137 + $0x2d0] sm:$0xff] %v1254
        %1767 = vst [vmem:[%s137 + $0x2d8] sm:$0xff] %v1255
        %1768 = vst [vmem:[%s137 + $0x2e0] sm:$0xff] %v1256
        %1769 = vst [vmem:[%s137 + $0x2e8] sm:$0xff] %v1257
        %1770 = vst [vmem:[%s137 + $0x2f0] sm:$0xff] %v1258
        %1771 = vst [vmem:[%s137 + $0x2f8] sm:$0xff] %v1259
        %1772 = vst [vmem:[%s137 + $0x300] sm:$0xff] %v1260
        %1773 = vst [vmem:[%s137 + $0x308] sm:$0xff] %v1261
        %1774 = vst [vmem:[%s137 + $0x310] sm:$0xff] %v1262
        %1775 = vst [vmem:[%s137 + $0x318] sm:$0xff] %v1263
        %1776 = vst [vmem:[%s137 + $0x320] sm:$0xff] %v1264
        %1777 = vst [vmem:[%s137 + $0x328] sm:$0xff] %v1265
        %1778 = vst [vmem:[%s137 + $0x330] sm:$0xff] %v1266
        %1779 = vst [vmem:[%s137 + $0x338] sm:$0xff] %v1267
        %1780 = vst [vmem:[%s137 + $0x340] sm:$0xff] %v1268
        %1781 = vst [vmem:[%s137 + $0x348] sm:$0xff] %v1269
        %1782 = vst [vmem:[%s137 + $0x350] sm:$0xff] %v1270
        %1783 = vst [vmem:[%s137 + $0x358] sm:$0xff] %v1271
        %1784 = vst [vmem:[%s137 + $0x360] sm:$0xff] %v1272
        %1785 = vst [vmem:[%s137 + $0x368] sm:$0xff] %v1273
        %1786 = vst [vmem:[%s137 + $0x370] sm:$0xff] %v1274
        %1787 = vst [vmem:[%s137 + $0x378] sm:$0xff] %v1275
        %1788 = vst [vmem:[%s137 + $0x380] sm:$0xff] %v1276
        %1789 = vst [vmem:[%s137 + $0x388] sm:$0xff] %v1277
        %1790 = vst [vmem:[%s137 + $0x390] sm:$0xff] %v1278
        %1791 = vst [vmem:[%s137 + $0x398] sm:$0xff] %v1279
        %1792 = vst [vmem:[%s137 + $0x3a0] sm:$0xff] %v1280
        %1793 = vst [vmem:[%s137 + $0x3a8] sm:$0xff] %v1281
        %1794 = vst [vmem:[%s137 + $0x3b0] sm:$0xff] %v1282
        %1795 = vst [vmem:[%s137 + $0x3b8] sm:$0xff] %v1283
        %1796 = vst [vmem:[%s137 + $0x3c0] sm:$0xff] %v1284
        %1797 = vst [vmem:[%s137 + $0x3c8] sm:$0xff] %v1285
        %1798 = vst [vmem:[%s137 + $0x3d0] sm:$0xff] %v1286
        %1799 = vst [vmem:[%s137 + $0x3d8] sm:$0xff] %v1287
        %1800 = vst [vmem:[%s137 + $0x3e0] sm:$0xff] %v1288
        %1801 = vst [vmem:[%s137 + $0x3e8] sm:$0xff] %v1289
        %1802 = vst [vmem:[%s137 + $0x3f0] sm:$0xff] %v1290
        %1803 = vst [vmem:[%s137 + $0x3f8] sm:$0xff] %v1291
        %1804 = vst [vmem:[%s137 + $0x400] sm:$0xff] %v1292
        %1805 = vst [vmem:[%s137 + $0x408] sm:$0xff] %v1293
        %1806 = vst [vmem:[%s137 + $0x410] sm:$0xff] %v1294
        %1807 = vst [vmem:[%s137 + $0x418] sm:$0xff] %v1295
        %1808 = vst [vmem:[%s137 + $0x420] sm:$0xff] %v1296
        %1809 = vst [vmem:[%s137 + $0x428] sm:$0xff] %v1297
        %1810 = vst [vmem:[%s137 + $0x430] sm:$0xff] %v1298
        %1811 = vst [vmem:[%s137 + $0x438] sm:$0xff] %v1299
        %1812 = vst [vmem:[%s137 + $0x440] sm:$0xff] %v1300
        %1813 = vst [vmem:[%s137 + $0x448] sm:$0xff] %v1301
        %1814 = vst [vmem:[%s137 + $0x450] sm:$0xff] %v1302
        %1815 = vst [vmem:[%s137 + $0x458] sm:$0xff] %v1303
        %1816 = vst [vmem:[%s137 + $0x460] sm:$0xff] %v1304
        %1817 = vst [vmem:[%s137 + $0x468] sm:$0xff] %v1305
        %1818 = vst [vmem:[%s137 + $0x470] sm:$0xff] %v1306
        %1819 = vst [vmem:[%s137 + $0x478] sm:$0xff] %v1307
        %1820 = vst [vmem:[%s137 + $0x480] sm:$0xff] %v1308
        %1821 = vst [vmem:[%s137 + $0x488] sm:$0xff] %v1309
        %1822 = vst [vmem:[%s137 + $0x490] sm:$0xff] %v1310
        %1823 = vst [vmem:[%s137 + $0x498] sm:$0xff] %v1311
        %1824 = vst [vmem:[%s137 + $0x4a0] sm:$0xff] %v1312
        %1825 = vst [vmem:[%s137 + $0x4a8] sm:$0xff] %v1313
        %1826 = vst [vmem:[%s137 + $0x4b0] sm:$0xff] %v1314
        %1827 = vst [vmem:[%s137 + $0x4b8] sm:$0xff] %v1315
        %1828 = vst [vmem:[%s137 + $0x4c0] sm:$0xff] %v1316
        %1829 = vst [vmem:[%s137 + $0x4c8] sm:$0xff] %v1317
        %1830 = vst [vmem:[%s137 + $0x4d0] sm:$0xff] %v1318
        %1831 = vst [vmem:[%s137 + $0x4d8] sm:$0xff] %v1319
        %1832 = vst [vmem:[%s137 + $0x4e0] sm:$0xff] %v1320
        %1833 = vst [vmem:[%s137 + $0x4e8] sm:$0xff] %v1321
        %1834 = vst [vmem:[%s137 + $0x4f0] sm:$0xff] %v1322
        %1835 = vst [vmem:[%s137 + $0x4f8] sm:$0xff] %v1323
        %1836 = vst [vmem:[%s137 + $0x500] sm:$0xff] %v1324
        %1837 = vst [vmem:[%s137 + $0x508] sm:$0xff] %v1325
        %1838 = vst [vmem:[%s137 + $0x510] sm:$0xff] %v1326
        %1839 = vst [vmem:[%s137 + $0x518] sm:$0xff] %v1327
        %1840 = vst [vmem:[%s137 + $0x520] sm:$0xff] %v1328
        %1841 = vst [vmem:[%s137 + $0x528] sm:$0xff] %v1329
        %1842 = vst [vmem:[%s137 + $0x530] sm:$0xff] %v1330
        %1843 = vst [vmem:[%s137 + $0x538] sm:$0xff] %v1331
        %1844 = vst [vmem:[%s137 + $0x540] sm:$0xff] %v1332
        %1845 = vst [vmem:[%s137 + $0x548] sm:$0xff] %v1333
        %1846 = vst [vmem:[%s137 + $0x550] sm:$0xff] %v1334
        %1847 = vst [vmem:[%s137 + $0x558] sm:$0xff] %v1335
        %1848 = vst [vmem:[%s137 + $0x560] sm:$0xff] %v1336
        %1849 = vst [vmem:[%s137 + $0x568] sm:$0xff] %v1337
        %1850 = vst [vmem:[%s137 + $0x570] sm:$0xff] %v1338
        %1851 = vst [vmem:[%s137 + $0x578] sm:$0xff] %v1339
        %1852 = vst [vmem:[%s137 + $0x580] sm:$0xff] %v1340
        %1853 = vst [vmem:[%s137 + $0x588] sm:$0xff] %v1341
        %1854 = vst [vmem:[%s137 + $0x590] sm:$0xff] %v1342
        %1855 = vst [vmem:[%s137 + $0x598] sm:$0xff] %v1343
        %1856 = vst [vmem:[%s137 + $0x5a0] sm:$0xff] %v1344
        %1857 = vst [vmem:[%s137 + $0x5a8] sm:$0xff] %v1345
        %1858 = vst [vmem:[%s137 + $0x5b0] sm:$0xff] %v1346
        %1859 = vst [vmem:[%s137 + $0x5b8] sm:$0xff] %v1347
        %1860 = vst [vmem:[%s137 + $0x5c0] sm:$0xff] %v1348
        %1861 = vst [vmem:[%s137 + $0x5c8] sm:$0xff] %v1349
        %1862 = vst [vmem:[%s137 + $0x5d0] sm:$0xff] %v1350
        %1863 = vst [vmem:[%s137 + $0x5d8] sm:$0xff] %v1351
        %1864 = vst [vmem:[%s137 + $0x5e0] sm:$0xff] %v1352
        %1865 = vst [vmem:[%s137 + $0x5e8] sm:$0xff] %v1353
        %1866 = vst [vmem:[%s137 + $0x5f0] sm:$0xff] %v1354
        %1867 = vst [vmem:[%s137 + $0x5f8] sm:$0xff] %v1355
        %1868 = vst [vmem:[%s137 + $0x600] sm:$0xff] %v1356
        %1869 = vst [vmem:[%s137 + $0x608] sm:$0xff] %v1357
        %1870 = vst [vmem:[%s137 + $0x610] sm:$0xff] %v1358
        %1871 = vst [vmem:[%s137 + $0x618] sm:$0xff] %v1359
        %1872 = vst [vmem:[%s137 + $0x620] sm:$0xff] %v1360
        %1873 = vst [vmem:[%s137 + $0x628] sm:$0xff] %v1361
        %1874 = vst [vmem:[%s137 + $0x630] sm:$0xff] %v1362
        %1875 = vst [vmem:[%s137 + $0x638] sm:$0xff] %v1363
        %1876 = vst [vmem:[%s137 + $0x640] sm:$0xff] %v1364
        %1877 = vst [vmem:[%s137 + $0x648] sm:$0xff] %v1365
        %1878 = vst [vmem:[%s137 + $0x650] sm:$0xff] %v1366
        %1879 = vst [vmem:[%s137 + $0x658] sm:$0xff] %v1367
        %1880 = vst [vmem:[%s137 + $0x660] sm:$0xff] %v1368
        %1881 = vst [vmem:[%s137 + $0x668] sm:$0xff] %v1369
        %1882 = vst [vmem:[%s137 + $0x670] sm:$0xff] %v1370
        %1883 = vst [vmem:[%s137 + $0x678] sm:$0xff] %v1371
        %1884 = vst [vmem:[%s137 + $0x680] sm:$0xff] %v1372
        %1885 = vst [vmem:[%s137 + $0x688] sm:$0xff] %v1373
        %1886 = vst [vmem:[%s137 + $0x690] sm:$0xff] %v1374
        %1887 = vst [vmem:[%s137 + $0x698] sm:$0xff] %v1375
        %1888 = vst [vmem:[%s137 + $0x6a0] sm:$0xff] %v1376
        %1889 = vst [vmem:[%s137 + $0x6a8] sm:$0xff] %v1377
        %1890 = vst [vmem:[%s137 + $0x6b0] sm:$0xff] %v1378
        %1891 = vst [vmem:[%s137 + $0x6b8] sm:$0xff] %v1379
        %1892 = vst [vmem:[%s137 + $0x6c0] sm:$0xff] %v1380
        %1893 = vst [vmem:[%s137 + $0x6c8] sm:$0xff] %v1381
        %1894 = vst [vmem:[%s137 + $0x6d0] sm:$0xff] %v1382
        %1895 = vst [vmem:[%s137 + $0x6d8] sm:$0xff] %v1383
        %1896 = vst [vmem:[%s137 + $0x6e0] sm:$0xff] %v1384
        %1897 = vst [vmem:[%s137 + $0x6e8] sm:$0xff] %v1385
        %1898 = vst [vmem:[%s137 + $0x6f0] sm:$0xff] %v1386
        %1899 = vst [vmem:[%s137 + $0x6f8] sm:$0xff] %v1387
        %1900 = vst [vmem:[%s137 + $0x700] sm:$0xff] %v1388
        %1901 = vst [vmem:[%s137 + $0x708] sm:$0xff] %v1389
        %1902 = vst [vmem:[%s137 + $0x710] sm:$0xff] %v1390
        %1903 = vst [vmem:[%s137 + $0x718] sm:$0xff] %v1391
        %1904 = vst [vmem:[%s137 + $0x720] sm:$0xff] %v1392
        %1905 = vst [vmem:[%s137 + $0x728] sm:$0xff] %v1393
        %1906 = vst [vmem:[%s137 + $0x730] sm:$0xff] %v1394
        %1907 = vst [vmem:[%s137 + $0x738] sm:$0xff] %v1395
        %1908 = vst [vmem:[%s137 + $0x740] sm:$0xff] %v1396
        %1909 = vst [vmem:[%s137 + $0x748] sm:$0xff] %v1397
        %1910 = vst [vmem:[%s137 + $0x750] sm:$0xff] %v1398
        %1911 = vst [vmem:[%s137 + $0x758] sm:$0xff] %v1399
        %1912 = vst [vmem:[%s137 + $0x760] sm:$0xff] %v1400
        %1913 = vst [vmem:[%s137 + $0x768] sm:$0xff] %v1401
        %1914 = vst [vmem:[%s137 + $0x770] sm:$0xff] %v1402
        %1915 = vst [vmem:[%s137 + $0x778] sm:$0xff] %v1403
        %1916 = vst [vmem:[%s137 + $0x780] sm:$0xff] %v1404
        %1917 = vst [vmem:[%s137 + $0x788] sm:$0xff] %v1405
        %1918 = vst [vmem:[%s137 + $0x790] sm:$0xff] %v1406
        %1919 = vst [vmem:[%s137 + $0x798] sm:$0xff] %v1407
        %1920 = vst [vmem:[%s137 + $0x7a0] sm:$0xff] %v1408
        %1921 = vst [vmem:[%s137 + $0x7a8] sm:$0xff] %v1409
        %1922 = vst [vmem:[%s137 + $0x7b0] sm:$0xff] %v1410
        %1923 = vst [vmem:[%s137 + $0x7b8] sm:$0xff] %v1411
        %1924 = vst [vmem:[%s137 + $0x7c0] sm:$0xff] %v1412
        %1925 = vst [vmem:[%s137 + $0x7c8] sm:$0xff] %v1413
        %1926 = vst [vmem:[%s137 + $0x7d0] sm:$0xff] %v1414
        %1927 = vst [vmem:[%s137 + $0x7d8] sm:$0xff] %v1415
        %1928 = vst [vmem:[%s137 + $0x7e0] sm:$0xff] %v1416
        %1929 = vst [vmem:[%s137 + $0x7e8] sm:$0xff] %v1417
        %1930 = vst [vmem:[%s137 + $0x7f0] sm:$0xff] %v1418
        %1931 = vst [vmem:[%s137 + $0x7f8] sm:$0xff] %v1419
        %1932 = vst [vmem:[%s137 + $0x800] sm:$0xff] %v1420
        %1933 = vst [vmem:[%s137 + $0x808] sm:$0xff] %v1421
        %1934 = vst [vmem:[%s137 + $0x810] sm:$0xff] %v1422
        %1935 = vst [vmem:[%s137 + $0x818] sm:$0xff] %v1423
        %1936 = vst [vmem:[%s137 + $0x820] sm:$0xff] %v1424
        %1937 = vst [vmem:[%s137 + $0x828] sm:$0xff] %v1425
        %1938 = vst [vmem:[%s137 + $0x830] sm:$0xff] %v1426
        %1939 = vst [vmem:[%s137 + $0x838] sm:$0xff] %v1427
        %1940 = vst [vmem:[%s137 + $0x840] sm:$0xff] %v1428
        %1941 = vst [vmem:[%s137 + $0x848] sm:$0xff] %v1429
        %1942 = vst [vmem:[%s137 + $0x850] sm:$0xff] %v1430
        %1943 = vst [vmem:[%s137 + $0x858] sm:$0xff] %v1431
        %1944 = vst [vmem:[%s137 + $0x860] sm:$0xff] %v1432
        %1945 = vst [vmem:[%s137 + $0x868] sm:$0xff] %v1433
        %1946 = vst [vmem:[%s137 + $0x870] sm:$0xff] %v1434
        %1947 = vst [vmem:[%s137 + $0x878] sm:$0xff] %v1435
        %1948 = vst [vmem:[%s137 + $0x880] sm:$0xff] %v1436
        %1949 = vst [vmem:[%s137 + $0x888] sm:$0xff] %v1437
        %1950 = vst [vmem:[%s137 + $0x890] sm:$0xff] %v1438
        %1951 = vst [vmem:[%s137 + $0x898] sm:$0xff] %v1439
        %1952 = vst [vmem:[%s137 + $0x8a0] sm:$0xff] %v1440
        %1953 = vst [vmem:[%s137 + $0x8a8] sm:$0xff] %v1441
        %1954 = vst [vmem:[%s137 + $0x8b0] sm:$0xff] %v1442
        %1955 = vst [vmem:[%s137 + $0x8b8] sm:$0xff] %v1443
        %1956 = vst [vmem:[%s137 + $0x8c0] sm:$0xff] %v1444
        %1957 = vst [vmem:[%s137 + $0x8c8] sm:$0xff] %v1445
        %1958 = vst [vmem:[%s137 + $0x8d0] sm:$0xff] %v1446
        %1959 = vst [vmem:[%s137 + $0x8d8] sm:$0xff] %v1447
        %1960 = vst [vmem:[%s137 + $0x8e0] sm:$0xff] %v1448
        %1961 = vst [vmem:[%s137 + $0x8e8] sm:$0xff] %v1449
        %1962 = vst [vmem:[%s137 + $0x8f0] sm:$0xff] %v1450
        %1963 = vst [vmem:[%s137 + $0x8f8] sm:$0xff] %v1451
        %1964 = vst [vmem:[%s137 + $0x900] sm:$0xff] %v1452
        %1965 = vst [vmem:[%s137 + $0x908] sm:$0xff] %v1453
        %1966 = vst [vmem:[%s137 + $0x910] sm:$0xff] %v1454
        %1967 = vst [vmem:[%s137 + $0x918] sm:$0xff] %v1455
        %1968 = vst [vmem:[%s137 + $0x920] sm:$0xff] %v1456
        %1969 = vst [vmem:[%s137 + $0x928] sm:$0xff] %v1457
        %1970 = vst [vmem:[%s137 + $0x930] sm:$0xff] %v1458
        %1971 = vst [vmem:[%s137 + $0x938] sm:$0xff] %v1459
        %1972 = vst [vmem:[%s137 + $0x940] sm:$0xff] %v1460
        %1973 = vst [vmem:[%s137 + $0x948] sm:$0xff] %v1461
        %1974 = vst [vmem:[%s137 + $0x950] sm:$0xff] %v1462
        %1975 = vst [vmem:[%s137 + $0x958] sm:$0xff] %v1463
        %1976 = vst [vmem:[%s137 + $0x960] sm:$0xff] %v1464
        %1977 = vst [vmem:[%s137 + $0x968] sm:$0xff] %v1465
        %1978 = vst [vmem:[%s137 + $0x970] sm:$0xff] %v1466
        %1979 = vst [vmem:[%s137 + $0x978] sm:$0xff] %v1467
        %1980 = vst [vmem:[%s137 + $0x980] sm:$0xff] %v1468
        %1981 = vst [vmem:[%s137 + $0x988] sm:$0xff] %v1469
        %1982 = vst [vmem:[%s137 + $0x990] sm:$0xff] %v1470
        %1983 = vst [vmem:[%s137 + $0x998] sm:$0xff] %v1471
        %1984 = vst [vmem:[%s137 + $0x9a0] sm:$0xff] %v1472
        %1985 = vst [vmem:[%s137 + $0x9a8] sm:$0xff] %v1473
        %1986 = vst [vmem:[%s137 + $0x9b0] sm:$0xff] %v1474
        %1987 = vst [vmem:[%s137 + $0x9b8] sm:$0xff] %v1475
        %1988 = vst [vmem:[%s137 + $0x9c0] sm:$0xff] %v1476
        %1989 = vst [vmem:[%s137 + $0x9c8] sm:$0xff] %v1477
        %1990 = vst [vmem:[%s137 + $0x9d0] sm:$0xff] %v1478
        %1991 = vst [vmem:[%s137 + $0x9d8] sm:$0xff] %v1479
        %1992 = vst [vmem:[%s137 + $0x9e0] sm:$0xff] %v1480
        %1993 = vst [vmem:[%s137 + $0x9e8] sm:$0xff] %v1481
        %1994 = vst [vmem:[%s137 + $0x9f0] sm:$0xff] %v1482
        %1995 = vst [vmem:[%s137 + $0x9f8] sm:$0xff] %v1483
        %1996 = vst [vmem:[%s137 + $0xa00] sm:$0xff] %v1484
        %1997 = vst [vmem:[%s137 + $0xa08] sm:$0xff] %v1485
        %1998 = vst [vmem:[%s137 + $0xa10] sm:$0xff] %v1486
        %1999 = vst [vmem:[%s137 + $0xa18] sm:$0xff] %v1487
        %2000 = vst [vmem:[%s137 + $0xa20] sm:$0xff] %v1488
        %2001 = vst [vmem:[%s137 + $0xa28] sm:$0xff] %v1489
        %2002 = vst [vmem:[%s137 + $0xa30] sm:$0xff] %v1490
        %2003 = vst [vmem:[%s137 + $0xa38] sm:$0xff] %v1491
        %2004 = vst [vmem:[%s137 + $0xa40] sm:$0xff] %v1492
        %2005 = vst [vmem:[%s137 + $0xa48] sm:$0xff] %v1493
        %2006 = vst [vmem:[%s137 + $0xa50] sm:$0xff] %v1494
        %2007 = vst [vmem:[%s137 + $0xa58] sm:$0xff] %v1495
        %2008 = vst [vmem:[%s137 + $0xa60] sm:$0xff] %v1496
        %2009 = vst [vmem:[%s137 + $0xa68] sm:$0xff] %v1497
        %2010 = vst [vmem:[%s137 + $0xa70] sm:$0xff] %v1498
        %2011 = vst [vmem:[%s137 + $0xa78] sm:$0xff] %v1499
        %2012 = vst [vmem:[%s137 + $0xa80] sm:$0xff] %v1500
        %2013 = vst [vmem:[%s137 + $0xa88] sm:$0xff] %v1501
        %2014 = vst [vmem:[%s137 + $0xa90] sm:$0xff] %v1502
        %2015 = vst [vmem:[%s137 + $0xa98] sm:$0xff] %v1503
        %2016 = vst [vmem:[%s137 + $0xaa0] sm:$0xff] %v1504
        %2017 = vst [vmem:[%s137 + $0xaa8] sm:$0xff] %v1505
        %2018 = vst [vmem:[%s137 + $0xab0] sm:$0xff] %v1506
        %2019 = vst [vmem:[%s137 + $0xab8] sm:$0xff] %v1507
        %2020 = vst [vmem:[%s137 + $0xac0] sm:$0xff] %v1508
        %2021 = vst [vmem:[%s137 + $0xac8] sm:$0xff] %v1509
        %2022 = vst [vmem:[%s137 + $0xad0] sm:$0xff] %v1510
        %2023 = vst [vmem:[%s137 + $0xad8] sm:$0xff] %v1511
        %2024 = vst [vmem:[%s137 + $0xae0] sm:$0xff] %v1512
        %2025 = vst [vmem:[%s137 + $0xae8] sm:$0xff] %v1513
        %2026 = vst [vmem:[%s137 + $0xaf0] sm:$0xff] %v1514
        %2027 = vst [vmem:[%s137 + $0xaf8] sm:$0xff] %v1515
        %2028 = vst [vmem:[%s137 + $0xb00] sm:$0xff] %v1516
        %2029 = vst [vmem:[%s137 + $0xb08] sm:$0xff] %v1517
        %2030 = vst [vmem:[%s137 + $0xb10] sm:$0xff] %v1518
        %2031 = vst [vmem:[%s137 + $0xb18] sm:$0xff] %v1519
        %2032 = vst [vmem:[%s137 + $0xb20] sm:$0xff] %v1520
        %2033 = vst [vmem:[%s137 + $0xb28] sm:$0xff] %v1521
        %2034 = vst [vmem:[%s137 + $0xb30] sm:$0xff] %v1522
        %2035 = vst [vmem:[%s137 + $0xb38] sm:$0xff] %v1523
        %2036 = vst [vmem:[%s137 + $0xb40] sm:$0xff] %v1524
        %2037 = vst [vmem:[%s137 + $0xb48] sm:$0xff] %v1525
        %2038 = vst [vmem:[%s137 + $0xb50] sm:$0xff] %v1526
        %2039 = vst [vmem:[%s137 + $0xb58] sm:$0xff] %v1527
        %2040 = vst [vmem:[%s137 + $0xb60] sm:$0xff] %v1528
        %2041 = vst [vmem:[%s137 + $0xb68] sm:$0xff] %v1529
        %2042 = vst [vmem:[%s137 + $0xb70] sm:$0xff] %v1530
        %2043 = vst [vmem:[%s137 + $0xb78] sm:$0xff] %v1531
        %2044 = vst [vmem:[%s137 + $0xb80] sm:$0xff] %v1532
        %2045 = vst [vmem:[%s137 + $0xb88] sm:$0xff] %v1533
        %2046 = vst [vmem:[%s137 + $0xb90] sm:$0xff] %v1534
        %2047 = vst [vmem:[%s137 + $0xb98] sm:$0xff] %v1535
        %2048 = vst [vmem:[%s137 + $0xba0] sm:$0xff] %v1536
        %2049 = vst [vmem:[%s137 + $0xba8] sm:$0xff] %v1537
        %2050 = vst [vmem:[%s137 + $0xbb0] sm:$0xff] %v1538
        %2051 = vst [vmem:[%s137 + $0xbb8] sm:$0xff] %v1539
        %2052 = vst [vmem:[%s137 + $0xbc0] sm:$0xff] %v1540
        %2053 = vst [vmem:[%s137 + $0xbc8] sm:$0xff] %v1541
        %2054 = vst [vmem:[%s137 + $0xbd0] sm:$0xff] %v1542
        %2055 = vst [vmem:[%s137 + $0xbd8] sm:$0xff] %v1543
        %2056 = vst [vmem:[%s137 + $0xbe0] sm:$0xff] %v1544
        %2057 = vst [vmem:[%s137 + $0xbe8] sm:$0xff] %v1545
        %2058 = vst [vmem:[%s137 + $0xbf0] sm:$0xff] %v1546
        %2059 = vst [vmem:[%s137 + $0xbf8] sm:$0xff] %v1547
        %2060 = vst [vmem:[%s137 + $0xc00] sm:$0xff] %v1548
        %2061 = vst [vmem:[%s137 + $0xc08] sm:$0xff] %v1549
        %2062 = vst [vmem:[%s137 + $0xc10] sm:$0xff] %v1550
        %2063 = vst [vmem:[%s137 + $0xc18] sm:$0xff] %v1551
        %2064 = vst [vmem:[%s137 + $0xc20] sm:$0xff] %v1552
        %2065 = vst [vmem:[%s137 + $0xc28] sm:$0xff] %v1553
        %2066 = vst [vmem:[%s137 + $0xc30] sm:$0xff] %v1554
        %2067 = vst [vmem:[%s137 + $0xc38] sm:$0xff] %v1555
        %2068 = vst [vmem:[%s137 + $0xc40] sm:$0xff] %v1556
        %2069 = vst [vmem:[%s137 + $0xc48] sm:$0xff] %v1557
        %2070 = vst [vmem:[%s137 + $0xc50] sm:$0xff] %v1558
        %2071 = vst [vmem:[%s137 + $0xc58] sm:$0xff] %v1559
        %2072 = vst [vmem:[%s137 + $0xc60] sm:$0xff] %v1560
        %2073 = vst [vmem:[%s137 + $0xc68] sm:$0xff] %v1561
        %2074 = vst [vmem:[%s137 + $0xc70] sm:$0xff] %v1562
        %2075 = vst [vmem:[%s137 + $0xc78] sm:$0xff] %v1563
        %2076 = vst [vmem:[%s137 + $0xc80] sm:$0xff] %v1564
        %2077 = vst [vmem:[%s137 + $0xc88] sm:$0xff] %v1565
        %2078 = vst [vmem:[%s137 + $0xc90] sm:$0xff] %v1566
        %2079 = vst [vmem:[%s137 + $0xc98] sm:$0xff] %v1567
        %2080 = vst [vmem:[%s137 + $0xca0] sm:$0xff] %v1568
        %2081 = vst [vmem:[%s137 + $0xca8] sm:$0xff] %v1569
        %2082 = vst [vmem:[%s137 + $0xcb0] sm:$0xff] %v1570
        %2083 = vst [vmem:[%s137 + $0xcb8] sm:$0xff] %v1571
        %2084 = vst [vmem:[%s137 + $0xcc0] sm:$0xff] %v1572
        %2085 = vst [vmem:[%s137 + $0xcc8] sm:$0xff] %v1573
        %2086 = vst [vmem:[%s137 + $0xcd0] sm:$0xff] %v1574
        %2087 = vst [vmem:[%s137 + $0xcd8] sm:$0xff] %v1575
        %2088 = vst [vmem:[%s137 + $0xce0] sm:$0xff] %v1576
        %2089 = vst [vmem:[%s137 + $0xce8] sm:$0xff] %v1577
        %2090 = vst [vmem:[%s137 + $0xcf0] sm:$0xff] %v1578
        %2091 = vst [vmem:[%s137 + $0xcf8] sm:$0xff] %v1579
        %2092 = vst [vmem:[%s137 + $0xd00] sm:$0xff] %v1580
        %2093 = vst [vmem:[%s137 + $0xd08] sm:$0xff] %v1581
        %2094 = vst [vmem:[%s137 + $0xd10] sm:$0xff] %v1582
        %2095 = vst [vmem:[%s137 + $0xd18] sm:$0xff] %v1583
        %2096 = vst [vmem:[%s137 + $0xd20] sm:$0xff] %v1584
        %2097 = vst [vmem:[%s137 + $0xd28] sm:$0xff] %v1585
        %2098 = vst [vmem:[%s137 + $0xd30] sm:$0xff] %v1586
        %2099 = vst [vmem:[%s137 + $0xd38] sm:$0xff] %v1587
        %2100 = vst [vmem:[%s137 + $0xd40] sm:$0xff] %v1588
        %2101 = vst [vmem:[%s137 + $0xd48] sm:$0xff] %v1589
        %2102 = vst [vmem:[%s137 + $0xd50] sm:$0xff] %v1590
        %2103 = vst [vmem:[%s137 + $0xd58] sm:$0xff] %v1591
        %2104 = vst [vmem:[%s137 + $0xd60] sm:$0xff] %v1592
        %2105 = vst [vmem:[%s137 + $0xd68] sm:$0xff] %v1593
        %2106 = vst [vmem:[%s137 + $0xd70] sm:$0xff] %v1594
        %2107 = vst [vmem:[%s137 + $0xd78] sm:$0xff] %v1595
        %2108 = vst [vmem:[%s137 + $0xd80] sm:$0xff] %v1596
        %2109 = vst [vmem:[%s137 + $0xd88] sm:$0xff] %v1597
        %2110 = vst [vmem:[%s137 + $0xd90] sm:$0xff] %v1598
        %2111 = vst [vmem:[%s137 + $0xd98] sm:$0xff] %v1599
        %2112 = vst [vmem:[%s137 + $0xda0] sm:$0xff] %v1600
        %2113 = vst [vmem:[%s137 + $0xda8] sm:$0xff] %v1601
        %2114 = vst [vmem:[%s137 + $0xdb0] sm:$0xff] %v1602
        %2115 = vst [vmem:[%s137 + $0xdb8] sm:$0xff] %v1603
        %2116 = vst [vmem:[%s137 + $0xdc0] sm:$0xff] %v1604
        %2117 = vst [vmem:[%s137 + $0xdc8] sm:$0xff] %v1605
        %2118 = vst [vmem:[%s137 + $0xdd0] sm:$0xff] %v1606
        %2119 = vst [vmem:[%s137 + $0xdd8] sm:$0xff] %v1607
        %2120 = vst [vmem:[%s137 + $0xde0] sm:$0xff] %v1608
        %2121 = vst [vmem:[%s137 + $0xde8] sm:$0xff] %v1609
        %2122 = vst [vmem:[%s137 + $0xdf0] sm:$0xff] %v1610
        %2123 = vst [vmem:[%s137 + $0xdf8] sm:$0xff] %v1611
        %2124 = vst [vmem:[%s137 + $0xe00] sm:$0xff] %v1612
        %2125 = vst [vmem:[%s137 + $0xe08] sm:$0xff] %v1613
        %2126 = vst [vmem:[%s137 + $0xe10] sm:$0xff] %v1614
        %2127 = vst [vmem:[%s137 + $0xe18] sm:$0xff] %v1615
        %2128 = vst [vmem:[%s137 + $0xe20] sm:$0xff] %v1616
        %2129 = vst [vmem:[%s137 + $0xe28] sm:$0xff] %v1617
        %2130 = vst [vmem:[%s137 + $0xe30] sm:$0xff] %v1618
        %2131 = vst [vmem:[%s137 + $0xe38] sm:$0xff] %v1619
        %2132 = vst [vmem:[%s137 + $0xe40] sm:$0xff] %v1620
        %2133 = vst [vmem:[%s137 + $0xe48] sm:$0xff] %v1621
        %2134 = vst [vmem:[%s137 + $0xe50] sm:$0xff] %v1622
        %2135 = vst [vmem:[%s137 + $0xe58] sm:$0xff] %v1623
        %2136 = vst [vmem:[%s137 + $0xe60] sm:$0xff] %v1624
        %2137 = vst [vmem:[%s137 + $0xe68] sm:$0xff] %v1625
        %2138 = vst [vmem:[%s137 + $0xe70] sm:$0xff] %v1626
        %2139 = vst [vmem:[%s137 + $0xe78] sm:$0xff] %v1627
        %2140 = vst [vmem:[%s137 + $0xe80] sm:$0xff] %v1628
        %2141 = vst [vmem:[%s137 + $0xe88] sm:$0xff] %v1629
        %2142 = vst [vmem:[%s137 + $0xe90] sm:$0xff] %v1630
        %2143 = vst [vmem:[%s137 + $0xe98] sm:$0xff] %v1631
        %2144 = vst [vmem:[%s137 + $0xea0] sm:$0xff] %v1632
        %2145 = vst [vmem:[%s137 + $0xea8] sm:$0xff] %v1633
        %2146 = vst [vmem:[%s137 + $0xeb0] sm:$0xff] %v1634
        %2147 = vst [vmem:[%s137 + $0xeb8] sm:$0xff] %v1635
        %2148 = vst [vmem:[%s137 + $0xec0] sm:$0xff] %v1636
        %2149 = vst [vmem:[%s137 + $0xec8] sm:$0xff] %v1637
        %2150 = vst [vmem:[%s137 + $0xed0] sm:$0xff] %v1638
        %2151 = vst [vmem:[%s137 + $0xed8] sm:$0xff] %v1639
        %2152 = vst [vmem:[%s137 + $0xee0] sm:$0xff] %v1640
        %2153 = vst [vmem:[%s137 + $0xee8] sm:$0xff] %v1641
        %2154 = vst [vmem:[%s137 + $0xef0] sm:$0xff] %v1642
        %2155 = vst [vmem:[%s137 + $0xef8] sm:$0xff] %v1643
        %2156 = vst [vmem:[%s137 + $0xf00] sm:$0xff] %v1644
        %2157 = vst [vmem:[%s137 + $0xf08] sm:$0xff] %v1645
        %2158 = vst [vmem:[%s137 + $0xf10] sm:$0xff] %v1646
        %2159 = vst [vmem:[%s137 + $0xf18] sm:$0xff] %v1647
        %2160 = vst [vmem:[%s137 + $0xf20] sm:$0xff] %v1648
        %2161 = vst [vmem:[%s137 + $0xf28] sm:$0xff] %v1649
        %2162 = vst [vmem:[%s137 + $0xf30] sm:$0xff] %v1650
        %2163 = vst [vmem:[%s137 + $0xf38] sm:$0xff] %v1651
        %2164 = vst [vmem:[%s137 + $0xf40] sm:$0xff] %v1652
        %2165 = vst [vmem:[%s137 + $0xf48] sm:$0xff] %v1653
        %2166 = vst [vmem:[%s137 + $0xf50] sm:$0xff] %v1654
        %2167 = vst [vmem:[%s137 + $0xf58] sm:$0xff] %v1655
        %2168 = vst [vmem:[%s137 + $0xf60] sm:$0xff] %v1656
        %2169 = vst [vmem:[%s137 + $0xf68] sm:$0xff] %v1657
        %2170 = vst [vmem:[%s137 + $0xf70] sm:$0xff] %v1658
        %2171 = vst [vmem:[%s137 + $0xf78] sm:$0xff] %v1659
        %2172 = vst [vmem:[%s137 + $0xf80] sm:$0xff] %v1660
        %2173 = vst [vmem:[%s137 + $0xf88] sm:$0xff] %v1661
        %2174 = vst [vmem:[%s137 + $0xf90] sm:$0xff] %v1662
        %2175 = vst [vmem:[%s137 + $0xf98] sm:$0xff] %v1663
        %2176 = vst [vmem:[%s137 + $0xfa0] sm:$0xff] %v1664
        %2177 = vst [vmem:[%s137 + $0xfa8] sm:$0xff] %v1665
        %2178 = vst [vmem:[%s137 + $0xfb0] sm:$0xff] %v1666
        %2179 = vst [vmem:[%s137 + $0xfb8] sm:$0xff] %v1667
        %2180 = vst [vmem:[%s137 + $0xfc0] sm:$0xff] %v1668
        %2181 = vst [vmem:[%s137 + $0xfc8] sm:$0xff] %v1669
        %2182 = vst [vmem:[%s137 + $0xfd0] sm:$0xff] %v1670
        %2183 = vst [vmem:[%s137 + $0xfd8] sm:$0xff] %v1671
        %2184 = vst [vmem:[%s137 + $0xfe0] sm:$0xff] %v1672
        %2185 = vst [vmem:[%s137 + $0xfe8] sm:$0xff] %v1673
        %2186 = vst [vmem:[%s137 + $0xff0] sm:$0xff] %v1674
        %2187 = vst [vmem:[%s137 + $0xff8] sm:$0xff] %v1675
        %s2188 = sand.u32 %s52, 1
        %s2189 = scalar_lea.sflag [#allocation4], %s2188
        %s2190 = sand.u32 %s52, 1
        %s2191 = smul.addr %s2190, 4096
        %s2192 = scalar_lea.vmem [#allocation5], %s2191
        // Predicated region
        $region29: #{tpu_custom_call.1} parent=23 // pred_check
          %p2193 = pneg %p62
        $region30: #{tpu_custom_call.1} parent=23 // pred_check_branch
          %2195 = sbr.rel (%p2193) target = $region32
        $region31: #{tpu_custom_call.1} parent=23 // pred_region
          %s2196 = smul.u32 64, %s18
          %2198 = vsyncadd %s2189, 0
          %s2199 = smul.addr %s2196, 8
          %s2200 = smul.addr %s2199, 8
          %s2201 = scalar_lea.hbm %s1, %s2200
          %s2202 = sshll.u32 %s2192, 4
          %s2203 = int_to_ptr.vmem [resolvable:$true] %s2202
          %s2204 = sshll.u32 %s2201, 4
          %s2205 = int_to_ptr.hbm [resolvable:$true] %s2204
          %2210 = dma.vmem_to_hbm [thread:$0]  %s2203, 65536, %s2205, %s2189, 1024, 1024, 64
        $region32: #{tpu_custom_call.1} parent=23 // pred_fallthru
          _
      $region24: #{tpu_custom_call.1} parent=5 // pred_fallthru
        _
      %p2211 = scmp.le.s32.totalorder 2, %s13
      // Predicated region
      $region33: #{tpu_custom_call.1} parent=5 // pred_check
        %p2212 = pneg %p2211
      $region34: #{tpu_custom_call.1} parent=5 // pred_check_branch
        %2214 = sbr.rel (%p2212) target = $region36
      $region35: #{tpu_custom_call.1} parent=5 // pred_region
        %s2215 = ssub.s32 %s13, 2
        // Predicated region
        $region37: #{tpu_custom_call.1} parent=35 // pred_check
          %p2216 = pneg %p68
        $region38: #{tpu_custom_call.1} parent=35 // pred_check_branch
          %2218 = sbr.rel (%p2216) target = $region40
        $region39: #{tpu_custom_call.1} parent=35 // pred_region
          %s2219 = sand.u32 %s53, 1
          %s2220 = scalar_lea.sflag [#allocation4], %s2219
          %s2221 = sand.u32 %s53, 1
          %s2222 = smul.addr %s2221, 4096
          %s2223 = scalar_lea.vmem [#allocation5], %s2222
          %2225 = dma.done %s2220, 65536
        $region40: #{tpu_custom_call.1} parent=35 // pred_fallthru
          _
      $region36: #{tpu_custom_call.1} parent=5 // pred_fallthru
        _
    $region6: #{tpu_custom_call.1} parent=1 // loop_footer
      %s17 = sadd.s32 1, %s13
    $region7: #{tpu_custom_call.1} parent=1 // loop_footer_branch
      %12 = sbr.rel target = $region3
    $region8: #{tpu_custom_call.1} parent=1 // loop_exit
      _
    %2226 = vsyncpa [#allocation3], 1
    %s2227 = scalar_lea.sflag [#allocation3], 1
    %2228 = vsyncpa %s2227, 1
    %2229 = vsyncpa [#allocation4], 1
    %s2230 = scalar_lea.sflag [#allocation4], 1
    %2231 = vsyncpa %s2230, 1

</llo_original>
